<compile_context>
chip_gen: v5e
topology: v5e:2x2
jax: 0.10.0
libtpu: 0.0.40
codegen_flags: <defaults>
</compile_context>

<pallas_src>
import functools

import jax
import jax.numpy as jnp
from jax.experimental import pallas as pl
from jax.experimental.pallas import tpu as pltpu


# Safe on every generation: equals the scoped default on v6e/v7x, raises v5e's 16 MiB.
VMEM_LIMIT_BYTES = 32 * 1024 * 1024

LANE = 128          # lane width: pad feature dims to multiples of this
ROW_TILE = 128      # row tile (multiple of 16 -> valid for bf16 and f32 blocks)
K_TILE = 128        # reduction tile over A_hat columns


def _round_up(v, m):
    return ((v + m - 1) // m) * m


# --------------------------------------------------------------------------
# Kernel 1: feature transform  XW = X @ W   (row-tiled, weights resident)
# --------------------------------------------------------------------------
def _feature_matmul_kernel(x_ref, w_ref, o_ref):
    o_ref[...] = jnp.dot(
        x_ref[...], w_ref[...], preferred_element_type=jnp.float32
    ).astype(o_ref.dtype)


def _feature_matmul(x, w, *, tm, out_dtype=jnp.bfloat16):
    n_p, k_p = x.shape
    f_p = w.shape[1]
    return pl.pallas_call(
        _feature_matmul_kernel,
        out_shape=jax.ShapeDtypeStruct((n_p, f_p), out_dtype),
        grid=(n_p // tm,),
        in_specs=[
            pl.BlockSpec((tm, k_p), lambda i: (i, 0)),
            pl.BlockSpec((k_p, f_p), lambda i: (0, 0)),
        ],
        out_specs=pl.BlockSpec((tm, f_p), lambda i: (i, 0)),
        compiler_params=pltpu.CompilerParams(
            dimension_semantics=("parallel",),
            vmem_limit_bytes=VMEM_LIMIT_BYTES,
        ),
    )(x, w)


# --------------------------------------------------------------------------
# Kernel 2: layer-1 aggregation  H = relu(A_hat @ Z + b), tiled (rows, k)
# --------------------------------------------------------------------------
def _aggregate_relu_kernel(a_ref, z_ref, b_ref, o_ref, acc_ref):
    k = pl.program_id(1)

    @pl.when(k == 0)
    def _():
        acc_ref[...] = jnp.zeros_like(acc_ref)

    # bf16 x bf16 -> f32 accumulate (native MXU path)
    acc_ref[...] += jnp.dot(
        a_ref[...], z_ref[...], preferred_element_type=jnp.float32
    )

    @pl.when(k == pl.num_programs(1) - 1)
    def _():
        o_ref[...] = jnp.maximum(acc_ref[...] + b_ref[...], 0.0).astype(o_ref.dtype)


def _aggregate_relu(a, z, b, *, tm, tk, out_dtype=jnp.bfloat16):
    n_p = a.shape[0]
    f_p = z.shape[1]
    return pl.pallas_call(
        _aggregate_relu_kernel,
        out_shape=jax.ShapeDtypeStruct((n_p, f_p), out_dtype),
        grid=(n_p // tm, n_p // tk),
        in_specs=[
            pl.BlockSpec((tm, tk), lambda i, k: (i, k)),    # A_hat tile
            pl.BlockSpec((tk, f_p), lambda i, k: (k, 0)),   # XW tile (k-slice)
            pl.BlockSpec((1, f_p), lambda i, k: (0, 0)),    # bias (resident)
        ],
        out_specs=pl.BlockSpec((tm, f_p), lambda i, k: (i, 0)),
        scratch_shapes=[pltpu.VMEM((tm, f_p), jnp.float32)],
        compiler_params=pltpu.CompilerParams(
            dimension_semantics=("parallel", "arbitrary"),
            vmem_limit_bytes=VMEM_LIMIT_BYTES,
        ),
    )(a, z, b)


# --------------------------------------------------------------------------
# Kernel 3 (FUSED): layer-2 aggregation + node mean.
#   out = mean_over_real_rows(A_hat @ Z) + b
# H2 is never materialized in HBM: per row-tile partial sums go straight into a
# resident [1, O] accumulator. Padded rows of A_hat are all-zero, so their
# A@Z rows are exactly zero and no row masking is needed; the bias is folded in
# once at finalization (layer 2 is linear, so this is exact).
# --------------------------------------------------------------------------
def _make_aggregate_mean_kernel(n_real):
    inv_n = 1.0 / float(n_real)

    def kernel(a_ref, z_ref, b_ref, mean_ref, acc_ref):
        i = pl.program_id(0)
        k = pl.program_id(1)
        last_i = pl.num_programs(0) - 1
        last_k = pl.num_programs(1) - 1

        @pl.when(jnp.logical_and(i == 0, k == 0))
        def _():
            mean_ref[...] = jnp.zeros_like(mean_ref)

        @pl.when(k == 0)
        def _():
            acc_ref[...] = jnp.zeros_like(acc_ref)

        acc_ref[...] += jnp.dot(
            a_ref[...], z_ref[...], preferred_element_type=jnp.float32
        )

        @pl.when(k == last_k)
        def _():
            mean_ref[...] += jnp.sum(acc_ref[...], axis=0, keepdims=True)

        @pl.when(jnp.logical_and(i == last_i, k == last_k))
        def _():
            mean_ref[...] = mean_ref[...] * inv_n + b_ref[...]

    return kernel


def _aggregate_mean(a, z, b, n_real, *, tm, tk):
    n_p = a.shape[0]
    f_p = z.shape[1]
    return pl.pallas_call(
        _make_aggregate_mean_kernel(n_real),
        out_shape=jax.ShapeDtypeStruct((1, f_p), jnp.float32),
        grid=(n_p // tm, n_p // tk),
        in_specs=[
            pl.BlockSpec((tm, tk), lambda i, k: (i, k)),    # A_hat tile
            pl.BlockSpec((tk, f_p), lambda i, k: (k, 0)),   # XW2 tile (k-slice)
            pl.BlockSpec((1, f_p), lambda i, k: (0, 0)),    # bias (resident)
        ],
        # Resident [1, O] accumulator, revisited across both grid axes ->
        # both axes must be "arbitrary".
        out_specs=pl.BlockSpec((1, f_p), lambda i, k: (0, 0)),
        scratch_shapes=[pltpu.VMEM((tm, f_p), jnp.float32)],
        compiler_params=pltpu.CompilerParams(
            dimension_semantics=("arbitrary", "arbitrary"),
            vmem_limit_bytes=VMEM_LIMIT_BYTES,
        ),
    )(a, z, b)


# --------------------------------------------------------------------------
# Wrapper: pad to hardware-friendly shapes and chain the kernels
# --------------------------------------------------------------------------
@functools.partial(jax.jit, static_argnames=("tm", "tk"))
def gcn_forward(a_hat, x, w1, b1, w2, b2, *, tm=ROW_TILE, tk=K_TILE):
    n, in_dim = x.shape
    hidden = w1.shape[1]
    out_dim = w2.shape[1]

    n_p = _round_up(max(n, tm), tm)
    n_p = _round_up(n_p, tk)
    in_p = _round_up(in_dim, LANE)
    hid_p = _round_up(hidden, LANE)
    out_p = _round_up(out_dim, LANE)

    # Zero-padded, lane-dense operands. A_hat and activations feeding the A@XW
    # matmuls are bf16 (halves HBM/VMEM traffic of the dominant [N,N] operand);
    # MXU accumulation stays f32.
    a_p = jnp.pad(a_hat.astype(jnp.bfloat16), ((0, n_p - n), (0, n_p - n)))
    x_p = jnp.pad(x.astype(jnp.float32), ((0, n_p - n), (0, in_p - in_dim)))
    w1_p = jnp.pad(w1.astype(jnp.float32), ((0, in_p - in_dim), (0, hid_p - hidden)))
    b1_p = jnp.pad(b1.astype(jnp.float32).reshape(1, -1), ((0, 0), (0, hid_p - hidden)))
    w2_p = jnp.pad(w2.astype(jnp.float32), ((0, hid_p - hidden), (0, out_p - out_dim)))
    b2_p = jnp.pad(b2.astype(jnp.float32).reshape(1, -1), ((0, 0), (0, out_p - out_dim)))

    # ---- layer 1: GCNConv(in -> hidden) + ReLU ----
    xw1 = _feature_matmul(x_p, w1_p, tm=tm)                                  # [Np, Hp] bf16
    h1 = _aggregate_relu(a_p, xw1, b1_p, tm=tm, tk=tk)                       # [Np, Hp] bf16

    # ---- layer 2: GCNConv(hidden -> out) fused with mean over real nodes ----
    xw2 = _feature_matmul(h1, w2_p, tm=tm)                                   # [Np, Op] bf16
    mean = _aggregate_mean(a_p, xw2, b2_p, n, tm=tm, tk=tk)                  # [1, Op] f32

    return mean[0, :out_dim]


def normalized_adjacency(edge_index, num_nodes):
    """Dense symmetric-normalized adjacency with self-loops (PyG GCNConv default)."""
    src, dst = edge_index[0], edge_index[1]
    a = jnp.zeros((num_nodes, num_nodes), jnp.float32)
    a = a.at[dst, src].set(1.0)                       # message src -> dst
    a = a + jnp.eye(num_nodes, dtype=jnp.float32)     # self loops
    deg = jnp.sum(a, axis=1)
    d_inv_sqrt = jnp.where(deg > 0, 1.0 / jnp.sqrt(deg), 0.0)
    return d_inv_sqrt[:, None] * a * d_inv_sqrt[None, :]


if __name__ == "__main__":
    # Small deterministic problem, big enough to exercise multi-tile grids:
    # N=300 nodes (padded to 384 -> 3x3 aggregation grid), in=16, hidden=32, out=16.
    N, IN_DIM, HIDDEN_DIM, OUT_DIM = 300, 16, 32, 16

    key = jax.random.PRNGKey(0)
    k_x, k_w1, k_b1, k_w2, k_b2 = jax.random.split(key, 5)

    x = jax.random.normal(k_x, (N, IN_DIM), jnp.float32)

    # Ring graph, both directions (2N directed edges).
    src = jnp.arange(N, dtype=jnp.int32)
    dst = (src + 1) % N
    edge_index = jnp.stack(
        [jnp.concatenate([src, dst]), jnp.concatenate([dst, src])], axis=0
    )

    w1 = jax.random.normal(k_w1, (IN_DIM, HIDDEN_DIM), jnp.float32) * (1.0 / jnp.sqrt(IN_DIM))
    b1 = jax.random.normal(k_b1, (1, HIDDEN_DIM), jnp.float32) * 0.01
    w2 = jax.random.normal(k_w2, (HIDDEN_DIM, OUT_DIM), jnp.float32) * (1.0 / jnp.sqrt(HIDDEN_DIM))
    b2 = jax.random.normal(k_b2, (1, OUT_DIM), jnp.float32) * 0.01

    a_hat = normalized_adjacency(edge_index, N)

    out = gcn_forward(a_hat, x, w1, b1, w2, b2)
    out = jax.block_until_ready(out)

    # Pure-JAX f32 reference (kernel uses bf16 for A/activations -> loose tolerance).
    h1_ref = jnp.maximum(a_hat @ (x @ w1) + b1, 0.0)
    h2_ref = a_hat @ (h1_ref @ w2) + b2
    ref = h2_ref.mean(axis=0)

    assert out.shape == (OUT_DIM,)
    max_err = float(jnp.max(jnp.abs(out - ref)))
    assert jnp.allclose(out, ref, atol=5e-2, rtol=5e-2), f"max abs err = {max_err}"

    print("KERNEL_OK")
</pallas_src>

<mosaic_0001>
module attributes {stable_mosaic.version = 11 : i64} {
  func.func @_aggregate_relu_kernel(%arg0: i32, %arg1: i32, %arg2: memref<128x128xbf16, #tpu.memory_space<vmem>>, %arg3: memref<128x128xbf16, #tpu.memory_space<vmem>>, %arg4: memref<1x128xf32, #tpu.memory_space<vmem>>, %arg5: memref<128x128xbf16, #tpu.memory_space<vmem>>, %arg6: memref<128x128xf32, #tpu.memory_space<vmem>>) attributes {dimension_semantics = [#tpu.dimension_semantics<parallel>, #tpu.dimension_semantics<arbitrary>], iteration_bounds = array<i64: 3, 3>, scalar_prefetch = 0 : i64, scratch_operands = 1 : i64, tpu.core_type = #tpu.core_type<tc>, window_params = [{transform_indices = @transform_0, window_bounds = array<i64: 128, 128>}, {transform_indices = @transform_1, window_bounds = array<i64: 128, 128>}, {pipeline_mode = #tpu.pipeline_mode<synchronous>, transform_indices = @transform_2, window_bounds = array<i64: 1, 128>}, {transform_indices = @transform_3, window_bounds = array<i64: 128, 128>}]} {
    %c0_i32 = arith.constant 0 : i32
    %0 = arith.cmpi eq, %arg1, %c0_i32 : i32
    %1 = arith.extui %0 : i1 to i32
    %c0_i32_0 = arith.constant 0 : i32
    %2 = arith.cmpi ne, %1, %c0_i32_0 : i32
    scf.if %2 {
      %cst_9 = arith.constant 0.000000e+00 : f32
      %12 = vector.broadcast %cst_9 : f32 to vector<128x128xf32>
      %c0_10 = arith.constant 0 : index
      %c0_11 = arith.constant 0 : index
      %13 = vector.load %arg6[%c0_10, %c0_11] : memref<128x128xf32, #tpu.memory_space<vmem>>, vector<128x128xf32>
      tpu.vector_store %arg6[%c0_10, %c0_11], %12 {strides = array<i32>} : memref<128x128xf32, #tpu.memory_space<vmem>>, vector<128x128xf32>,
    } else {
    }
    %c0 = arith.constant 0 : index
    %c0_1 = arith.constant 0 : index
    %3 = vector.load %arg6[%c0, %c0_1] : memref<128x128xf32, #tpu.memory_space<vmem>>, vector<128x128xf32>
    %c0_2 = arith.constant 0 : index
    %c0_3 = arith.constant 0 : index
    %4 = vector.load %arg2[%c0_2, %c0_3] : memref<128x128xbf16, #tpu.memory_space<vmem>>, vector<128x128xbf16>
    %c0_4 = arith.constant 0 : index
    %c0_5 = arith.constant 0 : index
    %5 = vector.load %arg3[%c0_4, %c0_5] : memref<128x128xbf16, #tpu.memory_space<vmem>>, vector<128x128xbf16>
    %cst = arith.constant dense<0.000000e+00> : vector<128x128xf32>
    %6 = tpu.matmul %4, %5, %cst {dimension_numbers = #tpu.dot_dimension_numbers<[1], [0], [0], [1], [0, 0, 1, 1], [], []>} : vector<128x128xbf16>, vector<128x128xbf16>, vector<128x128xf32> -> vector<128x128xf32>
    %7 = arith.addf %3, %6 : vector<128x128xf32>
    %c0_6 = arith.constant 0 : index
    %c0_7 = arith.constant 0 : index
    %8 = vector.load %arg6[%c0_6, %c0_7] : memref<128x128xf32, #tpu.memory_space<vmem>>, vector<128x128xf32>
    tpu.vector_store %arg6[%c0_6, %c0_7], %7 {strides = array<i32>} : memref<128x128xf32, #tpu.memory_space<vmem>>, vector<128x128xf32>,
    %c2_i32 = arith.constant 2 : i32
    %9 = arith.cmpi eq, %arg1, %c2_i32 : i32
    %10 = arith.extui %9 : i1 to i32
    %c0_i32_8 = arith.constant 0 : i32
    %11 = arith.cmpi ne, %10, %c0_i32_8 : i32
    scf.if %11 {
      %c0_9 = arith.constant 0 : index
      %c0_10 = arith.constant 0 : index
      %12 = vector.load %arg6[%c0_9, %c0_10] : memref<128x128xf32, #tpu.memory_space<vmem>>, vector<128x128xf32>
      %c0_11 = arith.constant 0 : index
      %c0_12 = arith.constant 0 : index
      %13 = vector.load %arg4[%c0_11, %c0_12] : memref<1x128xf32, #tpu.memory_space<vmem>>, vector<1x128xf32>
      %14 = vector.broadcast %13 : vector<1x128xf32> to vector<128x128xf32>
      %15 = arith.addf %12, %14 : vector<128x128xf32>
      %cst_13 = arith.constant 0.000000e+00 : f32
      %16 = vector.broadcast %cst_13 : f32 to vector<128x128xf32>
      %17 = arith.maximumf %15, %16 : vector<128x128xf32>
      %18 = arith.truncf %17 : vector<128x128xf32> to vector<128x128xbf16>
      %c0_14 = arith.constant 0 : index
      %c0_15 = arith.constant 0 : index
      %19 = vector.load %arg5[%c0_14, %c0_15] : memref<128x128xbf16, #tpu.memory_space<vmem>>, vector<128x128xbf16>
      tpu.vector_store %arg5[%c0_14, %c0_15], %18 {strides = array<i32>} : memref<128x128xbf16, #tpu.memory_space<vmem>>, vector<128x128xbf16>,
    } else {
    }
    return
  }
  func.func @transform_0(%arg0: i32, %arg1: i32) -> (i32, i32) {
    %c0_i32 = arith.constant 0 : i32
    return %arg0, %arg1 : i32, i32
  }
  func.func @transform_1(%arg0: i32, %arg1: i32) -> (i32, i32) {
    %c0_i32 = arith.constant 0 : i32
    %c0_i32_0 = arith.constant 0 : i32
    return %arg1, %c0_i32 : i32, i32
  }
  func.func @transform_2(%arg0: i32, %arg1: i32) -> (i32, i32) {
    %c0_i32 = arith.constant 0 : i32
    %c0_i32_0 = arith.constant 0 : i32
    %c0_i32_1 = arith.constant 0 : i32
    return %c0_i32, %c0_i32_0 : i32, i32
  }
  func.func @transform_3(%arg0: i32, %arg1: i32) -> (i32, i32) {
    %c0_i32 = arith.constant 0 : i32
    %c0_i32_0 = arith.constant 0 : i32
    return %arg0, %c0_i32 : i32, i32
  }
}

module attributes {stable_mosaic.version = 11 : i64} {
  func.func @_feature_matmul_kernel(%arg0: i32, %arg1: memref<128x128xf32, #tpu.memory_space<vmem>>, %arg2: memref<128x128xf32, #tpu.memory_space<vmem>>, %arg3: memref<128x128xbf16, #tpu.memory_space<vmem>>) attributes {dimension_semantics = [#tpu.dimension_semantics<parallel>], iteration_bounds = array<i64: 3>, scalar_prefetch = 0 : i64, scratch_operands = 0 : i64, tpu.core_type = #tpu.core_type<tc>, window_params = [{transform_indices = @transform_0, window_bounds = array<i64: 128, 128>}, {pipeline_mode = #tpu.pipeline_mode<synchronous>, transform_indices = @transform_1, window_bounds = array<i64: 128, 128>}, {transform_indices = @transform_2, window_bounds = array<i64: 128, 128>}]} {
    %c0 = arith.constant 0 : index
    %c0_0 = arith.constant 0 : index
    %0 = vector.load %arg1[%c0, %c0_0] : memref<128x128xf32, #tpu.memory_space<vmem>>, vector<128x128xf32>
    %c0_1 = arith.constant 0 : index
    %c0_2 = arith.constant 0 : index
    %1 = vector.load %arg2[%c0_1, %c0_2] : memref<128x128xf32, #tpu.memory_space<vmem>>, vector<128x128xf32>
    %cst = arith.constant dense<0.000000e+00> : vector<128x128xf32>
    %2 = tpu.matmul %0, %1, %cst {dimension_numbers = #tpu.dot_dimension_numbers<[1], [0], [0], [1], [0, 0, 1, 1], [], []>} : vector<128x128xf32>, vector<128x128xf32>, vector<128x128xf32> -> vector<128x128xf32>
    %3 = arith.truncf %2 : vector<128x128xf32> to vector<128x128xbf16>
    %c0_3 = arith.constant 0 : index
    %c0_4 = arith.constant 0 : index
    %4 = vector.load %arg3[%c0_3, %c0_4] : memref<128x128xbf16, #tpu.memory_space<vmem>>, vector<128x128xbf16>
    tpu.vector_store %arg3[%c0_3, %c0_4], %3 {strides = array<i32>} : memref<128x128xbf16, #tpu.memory_space<vmem>>, vector<128x128xbf16>,
    return
  }
  func.func @transform_0(%arg0: i32) -> (i32, i32) {
    %c0_i32 = arith.constant 0 : i32
    %c0_i32_0 = arith.constant 0 : i32
    return %arg0, %c0_i32 : i32, i32
  }
  func.func @transform_1(%arg0: i32) -> (i32, i32) {
    %c0_i32 = arith.constant 0 : i32
    %c0_i32_0 = arith.constant 0 : i32
    %c0_i32_1 = arith.constant 0 : i32
    return %c0_i32, %c0_i32_0 : i32, i32
  }
  func.func @transform_2(%arg0: i32) -> (i32, i32) {
    %c0_i32 = arith.constant 0 : i32
    %c0_i32_0 = arith.constant 0 : i32
    return %arg0, %c0_i32 : i32, i32
  }
}

module attributes {stable_mosaic.version = 11 : i64} {
  func.func @_feature_matmul_kernel(%arg0: i32, %arg1: memref<128x128xbf16, #tpu.memory_space<vmem>>, %arg2: memref<128x128xf32, #tpu.memory_space<vmem>>, %arg3: memref<128x128xbf16, #tpu.memory_space<vmem>>) attributes {dimension_semantics = [#tpu.dimension_semantics<parallel>], iteration_bounds = array<i64: 3>, scalar_prefetch = 0 : i64, scratch_operands = 0 : i64, tpu.core_type = #tpu.core_type<tc>, window_params = [{transform_indices = @transform_0, window_bounds = array<i64: 128, 128>}, {pipeline_mode = #tpu.pipeline_mode<synchronous>, transform_indices = @transform_1, window_bounds = array<i64: 128, 128>}, {transform_indices = @transform_2, window_bounds = array<i64: 128, 128>}]} {
    %c0 = arith.constant 0 : index
    %c0_0 = arith.constant 0 : index
    %0 = vector.load %arg1[%c0, %c0_0] : memref<128x128xbf16, #tpu.memory_space<vmem>>, vector<128x128xbf16>
    %c0_1 = arith.constant 0 : index
    %c0_2 = arith.constant 0 : index
    %1 = vector.load %arg2[%c0_1, %c0_2] : memref<128x128xf32, #tpu.memory_space<vmem>>, vector<128x128xf32>
    %cst = arith.constant dense<0.000000e+00> : vector<128x128xf32>
    %2 = tpu.matmul %0, %1, %cst {dimension_numbers = #tpu.dot_dimension_numbers<[1], [0], [0], [1], [0, 0, 1, 1], [], []>} : vector<128x128xbf16>, vector<128x128xf32>, vector<128x128xf32> -> vector<128x128xf32>
    %3 = arith.truncf %2 : vector<128x128xf32> to vector<128x128xbf16>
    %c0_3 = arith.constant 0 : index
    %c0_4 = arith.constant 0 : index
    %4 = vector.load %arg3[%c0_3, %c0_4] : memref<128x128xbf16, #tpu.memory_space<vmem>>, vector<128x128xbf16>
    tpu.vector_store %arg3[%c0_3, %c0_4], %3 {strides = array<i32>} : memref<128x128xbf16, #tpu.memory_space<vmem>>, vector<128x128xbf16>,
    return
  }
  func.func @transform_0(%arg0: i32) -> (i32, i32) {
    %c0_i32 = arith.constant 0 : i32
    %c0_i32_0 = arith.constant 0 : i32
    return %arg0, %c0_i32 : i32, i32
  }
  func.func @transform_1(%arg0: i32) -> (i32, i32) {
    %c0_i32 = arith.constant 0 : i32
    %c0_i32_0 = arith.constant 0 : i32
    %c0_i32_1 = arith.constant 0 : i32
    return %c0_i32, %c0_i32_0 : i32, i32
  }
  func.func @transform_2(%arg0: i32) -> (i32, i32) {
    %c0_i32 = arith.constant 0 : i32
    %c0_i32_0 = arith.constant 0 : i32
    return %arg0, %c0_i32 : i32, i32
  }
}

module attributes {stable_mosaic.version = 11 : i64} {
  func.func @kernel(%arg0: i32, %arg1: i32, %arg2: memref<128x128xbf16, #tpu.memory_space<vmem>>, %arg3: memref<128x128xbf16, #tpu.memory_space<vmem>>, %arg4: memref<1x128xf32, #tpu.memory_space<vmem>>, %arg5: memref<1x128xf32, #tpu.memory_space<vmem>>, %arg6: memref<128x128xf32, #tpu.memory_space<vmem>>) attributes {dimension_semantics = [#tpu.dimension_semantics<arbitrary>, #tpu.dimension_semantics<arbitrary>], iteration_bounds = array<i64: 3, 3>, scalar_prefetch = 0 : i64, scratch_operands = 1 : i64, tpu.core_type = #tpu.core_type<tc>, window_params = [{transform_indices = @transform_0, window_bounds = array<i64: 128, 128>}, {transform_indices = @transform_1, window_bounds = array<i64: 128, 128>}, {pipeline_mode = #tpu.pipeline_mode<synchronous>, transform_indices = @transform_2, window_bounds = array<i64: 1, 128>}, {pipeline_mode = #tpu.pipeline_mode<synchronous>, transform_indices = @transform_3, window_bounds = array<i64: 1, 128>}]} {
    %c0_i32 = arith.constant 0 : i32
    %0 = arith.cmpi eq, %arg0, %c0_i32 : i32
    %c0_i32_0 = arith.constant 0 : i32
    %1 = arith.cmpi eq, %arg1, %c0_i32_0 : i32
    %2 = arith.andi %0, %1 : i1
    %3 = arith.extui %2 : i1 to i32
    %c0_i32_1 = arith.constant 0 : i32
    %4 = arith.cmpi ne, %3, %c0_i32_1 : i32
    scf.if %4 {
      %cst_15 = arith.constant 0.000000e+00 : f32
      %22 = vector.broadcast %cst_15 : f32 to vector<1x128xf32>
      %c0_16 = arith.constant 0 : index
      %c0_17 = arith.constant 0 : index
      %23 = vector.load %arg5[%c0_16, %c0_17] : memref<1x128xf32, #tpu.memory_space<vmem>>, vector<1x128xf32>
      tpu.vector_store %arg5[%c0_16, %c0_17], %22 {strides = array<i32>} : memref<1x128xf32, #tpu.memory_space<vmem>>, vector<1x128xf32>,
    } else {
    }
    %c0_i32_2 = arith.constant 0 : i32
    %5 = arith.cmpi eq, %arg1, %c0_i32_2 : i32
    %6 = arith.extui %5 : i1 to i32
    %c0_i32_3 = arith.constant 0 : i32
    %7 = arith.cmpi ne, %6, %c0_i32_3 : i32
    scf.if %7 {
      %cst_15 = arith.constant 0.000000e+00 : f32
      %22 = vector.broadcast %cst_15 : f32 to vector<128x128xf32>
      %c0_16 = arith.constant 0 : index
      %c0_17 = arith.constant 0 : index
      %23 = vector.load %arg6[%c0_16, %c0_17] : memref<128x128xf32, #tpu.memory_space<vmem>>, vector<128x128xf32>
      tpu.vector_store %arg6[%c0_16, %c0_17], %22 {strides = array<i32>} : memref<128x128xf32, #tpu.memory_space<vmem>>, vector<128x128xf32>,
    } else {
    }
    %c0 = arith.constant 0 : index
    %c0_4 = arith.constant 0 : index
    %8 = vector.load %arg6[%c0, %c0_4] : memref<128x128xf32, #tpu.memory_space<vmem>>, vector<128x128xf32>
    %c0_5 = arith.constant 0 : index
    %c0_6 = arith.constant 0 : index
    %9 = vector.load %arg2[%c0_5, %c0_6] : memref<128x128xbf16, #tpu.memory_space<vmem>>, vector<128x128xbf16>
    %c0_7 = arith.constant 0 : index
    %c0_8 = arith.constant 0 : index
    %10 = vector.load %arg3[%c0_7, %c0_8] : memref<128x128xbf16, #tpu.memory_space<vmem>>, vector<128x128xbf16>
    %cst = arith.constant dense<0.000000e+00> : vector<128x128xf32>
    %11 = tpu.matmul %9, %10, %cst {dimension_numbers = #tpu.dot_dimension_numbers<[1], [0], [0], [1], [0, 0, 1, 1], [], []>} : vector<128x128xbf16>, vector<128x128xbf16>, vector<128x128xf32> -> vector<128x128xf32>
    %12 = arith.addf %8, %11 : vector<128x128xf32>
    %c0_9 = arith.constant 0 : index
    %c0_10 = arith.constant 0 : index
    %13 = vector.load %arg6[%c0_9, %c0_10] : memref<128x128xf32, #tpu.memory_space<vmem>>, vector<128x128xf32>
    tpu.vector_store %arg6[%c0_9, %c0_10], %12 {strides = array<i32>} : memref<128x128xf32, #tpu.memory_space<vmem>>, vector<128x128xf32>,
    %c2_i32 = arith.constant 2 : i32
    %14 = arith.cmpi eq, %arg1, %c2_i32 : i32
    %15 = arith.extui %14 : i1 to i32
    %c0_i32_11 = arith.constant 0 : i32
    %16 = arith.cmpi ne, %15, %c0_i32_11 : i32
    scf.if %16 {
      %c0_15 = arith.constant 0 : index
      %c0_16 = arith.constant 0 : index
      %22 = vector.load %arg5[%c0_15, %c0_16] : memref<1x128xf32, #tpu.memory_space<vmem>>, vector<1x128xf32>
      %c0_17 = arith.constant 0 : index
      %c0_18 = arith.constant 0 : index
      %23 = vector.load %arg6[%c0_17, %c0_18] : memref<128x128xf32, #tpu.memory_space<vmem>>, vector<128x128xf32>
      %cst_19 = arith.constant dense<0.000000e+00> : vector<128xf32>
      %24 = vector.multi_reduction <add>, %23, %cst_19 [0] : vector<128x128xf32> to vector<128xf32>
      %25 = vector.shape_cast %24 : vector<128xf32> to vector<1x128xf32>
      %26 = arith.addf %22, %25 : vector<1x128xf32>
      %c0_20 = arith.constant 0 : index
      %c0_21 = arith.constant 0 : index
      %27 = vector.load %arg5[%c0_20, %c0_21] : memref<1x128xf32, #tpu.memory_space<vmem>>, vector<1x128xf32>
      tpu.vector_store %arg5[%c0_20, %c0_21], %26 {strides = array<i32>} : memref<1x128xf32, #tpu.memory_space<vmem>>, vector<1x128xf32>,
    } else {
    }
    %c2_i32_12 = arith.constant 2 : i32
    %17 = arith.cmpi eq, %arg0, %c2_i32_12 : i32
    %c2_i32_13 = arith.constant 2 : i32
    %18 = arith.cmpi eq, %arg1, %c2_i32_13 : i32
    %19 = arith.andi %17, %18 : i1
    %20 = arith.extui %19 : i1 to i32
    %c0_i32_14 = arith.constant 0 : i32
    %21 = arith.cmpi ne, %20, %c0_i32_14 : i32
    scf.if %21 {
      %c0_15 = arith.constant 0 : index
      %c0_16 = arith.constant 0 : index
      %22 = vector.load %arg5[%c0_15, %c0_16] : memref<1x128xf32, #tpu.memory_space<vmem>>, vector<1x128xf32>
      %cst_17 = arith.constant 0.00333333341 : f32
      %23 = vector.broadcast %cst_17 : f32 to vector<1x128xf32>
      %24 = arith.mulf %22, %23 : vector<1x128xf32>
      %c0_18 = arith.constant 0 : index
      %c0_19 = arith.constant 0 : index
      %25 = vector.load %arg4[%c0_18, %c0_19] : memref<1x128xf32, #tpu.memory_space<vmem>>, vector<1x128xf32>
      %26 = arith.addf %24, %25 : vector<1x128xf32>
      %c0_20 = arith.constant 0 : index
      %c0_21 = arith.constant 0 : index
      %27 = vector.load %arg5[%c0_20, %c0_21] : memref<1x128xf32, #tpu.memory_space<vmem>>, vector<1x128xf32>
      tpu.vector_store %arg5[%c0_20, %c0_21], %26 {strides = array<i32>} : memref<1x128xf32, #tpu.memory_space<vmem>>, vector<1x128xf32>,
    } else {
    }
    return
  }
  func.func @transform_0(%arg0: i32, %arg1: i32) -> (i32, i32) {
    %c0_i32 = arith.constant 0 : i32
    return %arg0, %arg1 : i32, i32
  }
  func.func @transform_1(%arg0: i32, %arg1: i32) -> (i32, i32) {
    %c0_i32 = arith.constant 0 : i32
    %c0_i32_0 = arith.constant 0 : i32
    return %arg1, %c0_i32 : i32, i32
  }
  func.func @transform_2(%arg0: i32, %arg1: i32) -> (i32, i32) {
    %c0_i32 = arith.constant 0 : i32
    %c0_i32_0 = arith.constant 0 : i32
    %c0_i32_1 = arith.constant 0 : i32
    return %c0_i32, %c0_i32_0 : i32, i32
  }
  func.func @transform_3(%arg0: i32, %arg1: i32) -> (i32, i32) {
    %c0_i32 = arith.constant 0 : i32
    %c0_i32_0 = arith.constant 0 : i32
    %c0_i32_1 = arith.constant 0 : i32
    return %c0_i32, %c0_i32_0 : i32, i32
  }
}

</mosaic_0001>

<llo_original>
// kernel: gcn_forward.6
$region0: #{gcn_forward.6}
  #allocation0 [shape = 'u32[]', space=smem, size = 0x4, offset = 0x4, fixed_abs, tag = 'smem constant byte address 0x4 - core index']
  #allocation1 [shape = 'u32[72,128]{1,0:T(1,128)}', space=vmem, size = 0x9000, scoped, tag = 'internal scratch']
  %s0 = inlined_call_operand.vmem [shape: bf16[384,128], index: 0, kind: input, shape index: {}]
  %s1 = inlined_call_operand.vmem [shape: f32[128,128], index: 1, kind: input, shape index: {}]
  %s2 = inlined_call_operand.vmem [shape: bf16[384,128], index: 2, kind: output, shape index: {}]
  %s3 = sld [smem:[#allocation0]]
  $region41: #{gcn_forward.6} parent=0
    _
  %s5 = ssub.s32 1, %s3
  %s6 = scalar_select 0, %s5, %s3
  loop: start=0, step=1, limit=5
  $region2: #{gcn_forward.6} parent=0 // loop_pre_header
    _
  $region3: #{gcn_forward.6} parent=0 // loop_header
    %s8 = sphi 0, %s12
    %p9 = scmp.ge.s32.totalorder %s8, 5
    %s18 = sphi 0, %s20
    %s21 = sphi 0, %s18
    %s22 = sphi 0, %s21
    %s38 = sphi 0, %s22
    %s42 = sphi 0, %s42
    %s44 = sphi 0, %s42
    %s45 = sphi 0, %s44
    %s59 = sphi 0, %s45
    %s65 = sphi 0, %s67
    %s68 = sphi 0, %s65
    %s69 = sphi 0, %s68
    %s85 = sphi 0, %s69
  $region4: #{gcn_forward.6} parent=0 // loop_header_branch
    %11 = sbr.rel (%p9) target = $region8
  $region5: #{gcn_forward.6} parent=0 // loop_body
    %s13 = ssub.s32 %s8, 1
    %s14 = ssub.s32 %s8, 2
    %s15 = sadd.s32 %s8, 1
    %s16 = ssub.s32 %s8, %s15
    %p17 = scmp.eq.s32.totalorder %s16, 0
    %s19 = sadd.s32 %s18, 1
    %s20 = scalar_select %p17, %s18, %s19
    %p23 = pneg %p17
    %p24 = scmp.eq.s32.totalorder %s8, 2
    %p25 = por %p23, %p24
    %p26 = scmp.ne.s32.totalorder %s18, %s21
    %p27 = scmp.eq.s32.totalorder %s8, 0
    %p28 = por %p26, %p27
    %p29 = scmp.ne.s32.totalorder %s18, %s21
    %p30 = scmp.eq.s32.totalorder %s13, 2
    %p31 = por %p29, %p30
    %p32 = scmp.ne.s32.totalorder %s21, %s22
    %p33 = scmp.eq.s32.totalorder %s13, 0
    %p34 = por %p32, %p33
    %p35 = scmp.ne.s32.totalorder %s21, %s22
    %p36 = scmp.eq.s32.totalorder %s14, 2
    %p37 = por %p35, %p36
    %p39 = scmp.ne.s32.totalorder %s22, %s38
    %p40 = scmp.eq.s32.totalorder %s14, 0
    %p41 = por %p39, %p40
    %s43 = sadd.s32 %s42, 1
    %p46 = scmp.eq.s32.totalorder %s8, 2
    %p47 = scmp.ne.s32.totalorder %s42, %s44
    %p48 = scmp.eq.s32.totalorder %s8, 0
    %p49 = por %p47, %p48
    %p50 = scmp.ne.s32.totalorder %s42, %s44
    %p51 = scmp.eq.s32.totalorder %s13, 2
    %p52 = por %p50, %p51
    %p53 = scmp.ne.s32.totalorder %s44, %s45
    %p54 = scmp.eq.s32.totalorder %s13, 0
    %p55 = por %p53, %p54
    %p56 = scmp.ne.s32.totalorder %s44, %s45
    %p57 = scmp.eq.s32.totalorder %s14, 2
    %p58 = por %p56, %p57
    %p60 = scmp.ne.s32.totalorder %s45, %s59
    %p61 = scmp.eq.s32.totalorder %s14, 0
    %p62 = por %p60, %p61
    %s63 = ssub.s32 %s8, %s15
    %p64 = scmp.eq.s32.totalorder %s63, 0
    %s66 = sadd.s32 %s65, 1
    %s67 = scalar_select %p64, %s65, %s66
    %p70 = pneg %p64
    %p71 = scmp.eq.s32.totalorder %s8, 2
    %p72 = por %p70, %p71
    %p73 = scmp.ne.s32.totalorder %s65, %s68
    %p74 = scmp.eq.s32.totalorder %s8, 0
    %p75 = por %p73, %p74
    %p76 = scmp.ne.s32.totalorder %s65, %s68
    %p77 = scmp.eq.s32.totalorder %s13, 2
    %p78 = por %p76, %p77
    %p79 = scmp.ne.s32.totalorder %s68, %s69
    %p80 = scmp.eq.s32.totalorder %s13, 0
    %p81 = por %p79, %p80
    %p82 = scmp.ne.s32.totalorder %s68, %s69
    %p83 = scmp.eq.s32.totalorder %s14, 2
    %p84 = por %p82, %p83
    %p86 = scmp.ne.s32.totalorder %s69, %s85
    %p87 = scmp.eq.s32.totalorder %s14, 0
    %p88 = por %p86, %p87
    %p89 = scmp.le.s32.totalorder 1, %s8
    %p90 = scmp.lt.s32.totalorder %s8, 4
    %p91 = pnand %p89, %p90
    %p92 = pneg %p91
    // Predicated region
    $region9: #{gcn_forward.6} parent=5 // pred_check
      _
    $region10: #{gcn_forward.6} parent=5 // pred_check_branch
      %94 = sbr.rel (%p91) target = $region12
    $region11: #{gcn_forward.6} parent=5 // pred_region
      %s95 = ssub.s32 %s8, 1
      // Predicated region
      $region13: #{gcn_forward.6} parent=11 // pred_check
        %p96 = pneg %p55
      $region14: #{gcn_forward.6} parent=11 // pred_check_branch
        %98 = sbr.rel (%p96) target = $region16
      $region15: #{gcn_forward.6} parent=11 // pred_region
        _
      $region16: #{gcn_forward.6} parent=11 // pred_fallthru
        _
    $region12: #{gcn_forward.6} parent=5 // pred_fallthru
      _
    %p99 = scmp.lt.s32.totalorder %s8, 3
    // Predicated region
    $region17: #{gcn_forward.6} parent=5 // pred_check
      %p100 = pneg %p99
    $region18: #{gcn_forward.6} parent=5 // pred_check_branch
      %102 = sbr.rel (%p100) target = $region20
    $region19: #{gcn_forward.6} parent=5 // pred_region
      // Predicated region
      $region21: #{gcn_forward.6} parent=19 // pred_check
        %p103 = pneg %p28
      $region22: #{gcn_forward.6} parent=19 // pred_check_branch
        %105 = sbr.rel (%p103) target = $region24
      $region23: #{gcn_forward.6} parent=19 // pred_region
        %s106 = smul.u32 16, %s8
        %p107 = scmp.lt.s32.totalorder %s106, 47
        %s108 = scalar_select %p107, %s106, 47
        %s109 = smul.addr %s108, 4
        %s110 = scalar_lea.vmem %s0, %s109
        %s111 = smul.u32 16, %s8
      $region24: #{gcn_forward.6} parent=19 // pred_fallthru
        _
    $region20: #{gcn_forward.6} parent=5 // pred_fallthru
      _
    %p112 = scmp.le.s32.totalorder 1, %s8
    %p113 = scmp.lt.s32.totalorder %s8, 4
    %p114 = pnand %p112, %p113
    %p115 = pneg %p114
    // Predicated region
    $region25: #{gcn_forward.6} parent=5 // pred_check
      _
    $region26: #{gcn_forward.6} parent=5 // pred_check_branch
      %117 = sbr.rel (%p114) target = $region28
    $region27: #{gcn_forward.6} parent=5 // pred_region
      %s118 = ssub.s32 %s8, 1
      %s119 = smul.u32 16, %s13
      %p120 = scmp.lt.s32.totalorder %s119, 47
      %s121 = scalar_select %p120, %s119, 47
      %s122 = smul.addr %s121, 4
      %s123 = scalar_lea.vmem %s0, %s122
      %p124 = pneg %p34
      %p125 = pneg %p31
      %p126 = pneg %p55
      %p127 = pneg %p52
      %p128 = pneg %p81
      %p129 = pneg %p78
      %s130 = smul.u32 16, %s13
      %p131 = scmp.lt.s32.totalorder %s130, 47
      %s132 = scalar_select %p131, %s130, 47
      %s133 = smul.addr %s132, 4
      %s134 = scalar_lea.vmem %s2, %s133
      %s135 = smul.u32 16, %s13
      %p136 = scmp.lt.s32.totalorder %s135, 47
      %s137 = scalar_select %p136, %s135, 47
      %s138 = smul.addr %s137, 4
      %s139 = scalar_lea.vmem %s0, %s138
      %s140 = smul.u32 16, %s13
      %s141 = smul.u32 16, %s13
      %p142 = scmp.lt.s32.totalorder %s141, 47
      %s143 = scalar_select %p142, %s141, 47
      %s144 = smul.addr %s143, 4
      %s145 = scalar_lea.vmem %s2, %s144
      %s146 = smul.u32 16, %s13
      %v147 = vld [vmem:[%s139] sm:$0xf]
      %v148 = vld [vmem:[%s139 + $0x4] sm:$0xf]
      %v149 = vld [vmem:[%s139 + $0x8] sm:$0xf]
      %v150 = vld [vmem:[%s139 + $0xc] sm:$0xf]
      %v151 = vld [vmem:[%s139 + $0x10] sm:$0xf]
      %v152 = vld [vmem:[%s139 + $0x14] sm:$0xf]
      %v153 = vld [vmem:[%s139 + $0x18] sm:$0xf]
      %v154 = vld [vmem:[%s139 + $0x1c] sm:$0xf]
      %v155 = vld [vmem:[%s139 + $0x20] sm:$0xf]
      %v156 = vld [vmem:[%s139 + $0x24] sm:$0xf]
      %v157 = vld [vmem:[%s139 + $0x28] sm:$0xf]
      %v158 = vld [vmem:[%s139 + $0x2c] sm:$0xf]
      %v159 = vld [vmem:[%s139 + $0x30] sm:$0xf]
      %v160 = vld [vmem:[%s139 + $0x34] sm:$0xf]
      %v161 = vld [vmem:[%s139 + $0x38] sm:$0xf]
      %v162 = vld [vmem:[%s139 + $0x3c] sm:$0xf]
      %v163 = vld [vmem:[%s1] sm:$0xff]
      %v164 = vld [vmem:[%s1 + $0x8] sm:$0xff]
      %v165 = vld [vmem:[%s1 + $0x10] sm:$0xff]
      %v166 = vld [vmem:[%s1 + $0x18] sm:$0xff]
      %v167 = vld [vmem:[%s1 + $0x20] sm:$0xff]
      %v168 = vld [vmem:[%s1 + $0x28] sm:$0xff]
      %v169 = vld [vmem:[%s1 + $0x30] sm:$0xff]
      %v170 = vld [vmem:[%s1 + $0x38] sm:$0xff]
      %v171 = vld [vmem:[%s1 + $0x40] sm:$0xff]
      %v172 = vld [vmem:[%s1 + $0x48] sm:$0xff]
      %v173 = vld [vmem:[%s1 + $0x50] sm:$0xff]
      %v174 = vld [vmem:[%s1 + $0x58] sm:$0xff]
      %v175 = vld [vmem:[%s1 + $0x60] sm:$0xff]
      %v176 = vld [vmem:[%s1 + $0x68] sm:$0xff]
      %v177 = vld [vmem:[%s1 + $0x70] sm:$0xff]
      %v178 = vld [vmem:[%s1 + $0x78] sm:$0xff]
      %v195 = vunpack.c.l.b16 %v147
      %v196 = vunpack.c.l.b16 %v148
      %v197 = vunpack.c.l.b16 %v149
      %v198 = vunpack.c.l.b16 %v150
      %v199 = vunpack.c.l.b16 %v151
      %v200 = vunpack.c.l.b16 %v152
      %v201 = vunpack.c.l.b16 %v153
      %v202 = vunpack.c.l.b16 %v154
      %v203 = vunpack.c.l.b16 %v155
      %v204 = vunpack.c.l.b16 %v156
      %v205 = vunpack.c.l.b16 %v157
      %v206 = vunpack.c.l.b16 %v158
      %v207 = vunpack.c.l.b16 %v159
      %v208 = vunpack.c.l.b16 %v160
      %v209 = vunpack.c.l.b16 %v161
      %v210 = vunpack.c.l.b16 %v162
      %v211 = vpack.c.b16 %v196, %v195
      %v212 = vpack.c.b16 %v198, %v197
      %v213 = vpack.c.b16 %v200, %v199
      %v214 = vpack.c.b16 %v202, %v201
      %v215 = vpack.c.b16 %v204, %v203
      %v216 = vpack.c.b16 %v206, %v205
      %v217 = vpack.c.b16 %v208, %v207
      %v218 = vpack.c.b16 %v210, %v209
      %227 = vmatpush.msra.mxu0 %v178
      %228 = vmatpush.msra.mxu0 %v177
      %229 = vmatpush.msra.mxu0 %v176
      %230 = vmatpush.msra.mxu0 %v175
      %231 = vmatpush.msra.mxu0 %v174
      %232 = vmatpush.msra.mxu0 %v173
      %233 = vmatpush.msra.mxu0 %v172
      %234 = vmatpush.msra.mxu0 %v171
      %235 = vmatpush.msra.mxu0 %v170
      %236 = vmatpush.msra.mxu0 %v169
      %237 = vmatpush.msra.mxu0 %v168
      %238 = vmatpush.msra.mxu0 %v167
      %239 = vmatpush.msra.mxu0 %v166
      %240 = vmatpush.msra.mxu0 %v165
      %241 = vmatpush.msra.mxu0 %v164
      %242 = vmatpush.msra.mxu0 %v163
      %243 = vmatmul.bf16.gmra.mxu0 %v211
      %v244 = vpop.f32.mrf.mxu0
      %v245 = vadd.f32 0.0, %v244
      %v246 = vpop.f32.mrf.mxu0
      %v247 = vadd.f32 0.0, %v246
      %248 = vmatmul.bf16.gmra.mxu0 %v212
      %v249 = vpop.f32.mrf.mxu0
      %v250 = vadd.f32 0.0, %v249
      %v251 = vpop.f32.mrf.mxu0
      %v252 = vadd.f32 0.0, %v251
      %253 = vmatmul.bf16.gmra.mxu0 %v213
      %v254 = vpop.f32.mrf.mxu0
      %v255 = vadd.f32 0.0, %v254
      %v256 = vpop.f32.mrf.mxu0
      %v257 = vadd.f32 0.0, %v256
      %258 = vmatmul.bf16.gmra.mxu0 %v214
      %v259 = vpop.f32.mrf.mxu0
      %v260 = vadd.f32 0.0, %v259
      %v261 = vpop.f32.mrf.mxu0
      %v262 = vadd.f32 0.0, %v261
      %263 = vmatmul.bf16.gmra.mxu0 %v215
      %v264 = vpop.f32.mrf.mxu0
      %v265 = vadd.f32 0.0, %v264
      %v266 = vpop.f32.mrf.mxu0
      %v267 = vadd.f32 0.0, %v266
      %268 = vmatmul.bf16.gmra.mxu0 %v216
      %v269 = vpop.f32.mrf.mxu0
      %v270 = vadd.f32 0.0, %v269
      %v271 = vpop.f32.mrf.mxu0
      %v272 = vadd.f32 0.0, %v271
      %273 = vmatmul.bf16.gmra.mxu0 %v217
      %v274 = vpop.f32.mrf.mxu0
      %v275 = vadd.f32 0.0, %v274
      %v276 = vpop.f32.mrf.mxu0
      %v277 = vadd.f32 0.0, %v276
      %278 = vmatmul.bf16.gmra.mxu0 %v218
      %v279 = vpop.f32.mrf.mxu0
      %v280 = vadd.f32 0.0, %v279
      %v281 = vpop.f32.mrf.mxu0
      %v282 = vadd.f32 0.0, %v281
      %283 = vdwg.mxu0
      %v284 = vpack.c.bf16 %v245, %v245
      %v285 = vpack.c.bf16 %v247, %v247
      %v286 = vpack.c.bf16 %v250, %v250
      %v287 = vpack.c.bf16 %v252, %v252
      %v288 = vpack.c.bf16 %v255, %v255
      %v289 = vpack.c.bf16 %v257, %v257
      %v290 = vpack.c.bf16 %v260, %v260
      %v291 = vpack.c.bf16 %v262, %v262
      %v292 = vpack.c.bf16 %v265, %v265
      %v293 = vpack.c.bf16 %v267, %v267
      %v294 = vpack.c.bf16 %v270, %v270
      %v295 = vpack.c.bf16 %v272, %v272
      %v296 = vpack.c.bf16 %v275, %v275
      %v297 = vpack.c.bf16 %v277, %v277
      %v298 = vpack.c.bf16 %v280, %v280
      %v299 = vpack.c.bf16 %v282, %v282
      %300 = vst [vmem:[%s145] sm:$0xf] %v284
      %301 = vst [vmem:[%s145 + $0x4] sm:$0xf] %v285
      %302 = vst [vmem:[%s145 + $0x8] sm:$0xf] %v286
      %303 = vst [vmem:[%s145 + $0xc] sm:$0xf] %v287
      %304 = vst [vmem:[%s145 + $0x10] sm:$0xf] %v288
      %305 = vst [vmem:[%s145 + $0x14] sm:$0xf] %v289
      %306 = vst [vmem:[%s145 + $0x18] sm:$0xf] %v290
      %307 = vst [vmem:[%s145 + $0x1c] sm:$0xf] %v291
      %308 = vst [vmem:[%s145 + $0x20] sm:$0xf] %v292
      %309 = vst [vmem:[%s145 + $0x24] sm:$0xf] %v293
      %310 = vst [vmem:[%s145 + $0x28] sm:$0xf] %v294
      %311 = vst [vmem:[%s145 + $0x2c] sm:$0xf] %v295
      %312 = vst [vmem:[%s145 + $0x30] sm:$0xf] %v296
      %313 = vst [vmem:[%s145 + $0x34] sm:$0xf] %v297
      %314 = vst [vmem:[%s145 + $0x38] sm:$0xf] %v298
      %315 = vst [vmem:[%s145 + $0x3c] sm:$0xf] %v299
      %s316 = smul.u32 16, %s13
      %p317 = scmp.lt.s32.totalorder %s316, 47
      %s318 = scalar_select %p317, %s316, 47
      %s319 = smul.addr %s318, 4
      %s320 = scalar_lea.vmem %s2, %s319
      // Predicated region
      $region29: #{gcn_forward.6} parent=27 // pred_check
        %p321 = pneg %p78
      $region30: #{gcn_forward.6} parent=27 // pred_check_branch
        %323 = sbr.rel (%p321) target = $region32
      $region31: #{gcn_forward.6} parent=27 // pred_region
        %s324 = smul.u32 16, %s13
      $region32: #{gcn_forward.6} parent=27 // pred_fallthru
        _
    $region28: #{gcn_forward.6} parent=5 // pred_fallthru
      _
    %p325 = scmp.le.s32.totalorder 2, %s8
    // Predicated region
    $region33: #{gcn_forward.6} parent=5 // pred_check
      %p326 = pneg %p325
    $region34: #{gcn_forward.6} parent=5 // pred_check_branch
      %328 = sbr.rel (%p326) target = $region36
    $region35: #{gcn_forward.6} parent=5 // pred_region
      %s329 = ssub.s32 %s8, 2
      // Predicated region
      $region37: #{gcn_forward.6} parent=35 // pred_check
        %p330 = pneg %p84
      $region38: #{gcn_forward.6} parent=35 // pred_check_branch
        %332 = sbr.rel (%p330) target = $region40
      $region39: #{gcn_forward.6} parent=35 // pred_region
        %s333 = smul.u32 16, %s14
        %p334 = scmp.lt.s32.totalorder %s333, 47
        %s335 = scalar_select %p334, %s333, 47
        %s336 = smul.addr %s335, 4
        %s337 = scalar_lea.vmem %s2, %s336
      $region40: #{gcn_forward.6} parent=35 // pred_fallthru
        _
    $region36: #{gcn_forward.6} parent=5 // pred_fallthru
      _
  $region6: #{gcn_forward.6} parent=0 // loop_footer
    %s12 = sadd.s32 1, %s8
  $region7: #{gcn_forward.6} parent=0 // loop_footer_branch
    %7 = sbr.rel target = $region3
  $region8: #{gcn_forward.6} parent=0 // loop_exit
    _

// kernel: gcn_forward.4
$region0: #{gcn_forward.4}
  #allocation0 [shape = 'u32[]', space=smem, size = 0x4, offset = 0x4, fixed_abs, tag = 'smem constant byte address 0x4 - core index']
  #allocation1 [shape = 'u32[72,128]{1,0:T(1,128)}', space=vmem, size = 0x9000, scoped, tag = 'internal scratch']
  %s0 = inlined_call_operand.vmem [shape: f32[384,128], index: 0, kind: input, shape index: {}]
  %s1 = inlined_call_operand.vmem [shape: f32[128,128], index: 1, kind: input, shape index: {}]
  %s2 = inlined_call_operand.vmem [shape: bf16[384,128], index: 2, kind: output, shape index: {}]
  %s3 = sld [smem:[#allocation0]]
  $region41: #{gcn_forward.4} parent=0
    _
  %s5 = ssub.s32 1, %s3
  %s6 = scalar_select 0, %s5, %s3
  loop: start=0, step=1, limit=5
  $region2: #{gcn_forward.4} parent=0 // loop_pre_header
    _
  $region3: #{gcn_forward.4} parent=0 // loop_header
    %s8 = sphi 0, %s12
    %p9 = scmp.ge.s32.totalorder %s8, 5
    %s18 = sphi 0, %s20
    %s21 = sphi 0, %s18
    %s22 = sphi 0, %s21
    %s38 = sphi 0, %s22
    %s42 = sphi 0, %s42
    %s44 = sphi 0, %s42
    %s45 = sphi 0, %s44
    %s59 = sphi 0, %s45
    %s65 = sphi 0, %s67
    %s68 = sphi 0, %s65
    %s69 = sphi 0, %s68
    %s85 = sphi 0, %s69
  $region4: #{gcn_forward.4} parent=0 // loop_header_branch
    %11 = sbr.rel (%p9) target = $region8
  $region5: #{gcn_forward.4} parent=0 // loop_body
    %s13 = ssub.s32 %s8, 1
    %s14 = ssub.s32 %s8, 2
    %s15 = sadd.s32 %s8, 1
    %s16 = ssub.s32 %s8, %s15
    %p17 = scmp.eq.s32.totalorder %s16, 0
    %s19 = sadd.s32 %s18, 1
    %s20 = scalar_select %p17, %s18, %s19
    %p23 = pneg %p17
    %p24 = scmp.eq.s32.totalorder %s8, 2
    %p25 = por %p23, %p24
    %p26 = scmp.ne.s32.totalorder %s18, %s21
    %p27 = scmp.eq.s32.totalorder %s8, 0
    %p28 = por %p26, %p27
    %p29 = scmp.ne.s32.totalorder %s18, %s21
    %p30 = scmp.eq.s32.totalorder %s13, 2
    %p31 = por %p29, %p30
    %p32 = scmp.ne.s32.totalorder %s21, %s22
    %p33 = scmp.eq.s32.totalorder %s13, 0
    %p34 = por %p32, %p33
    %p35 = scmp.ne.s32.totalorder %s21, %s22
    %p36 = scmp.eq.s32.totalorder %s14, 2
    %p37 = por %p35, %p36
    %p39 = scmp.ne.s32.totalorder %s22, %s38
    %p40 = scmp.eq.s32.totalorder %s14, 0
    %p41 = por %p39, %p40
    %s43 = sadd.s32 %s42, 1
    %p46 = scmp.eq.s32.totalorder %s8, 2
    %p47 = scmp.ne.s32.totalorder %s42, %s44
    %p48 = scmp.eq.s32.totalorder %s8, 0
    %p49 = por %p47, %p48
    %p50 = scmp.ne.s32.totalorder %s42, %s44
    %p51 = scmp.eq.s32.totalorder %s13, 2
    %p52 = por %p50, %p51
    %p53 = scmp.ne.s32.totalorder %s44, %s45
    %p54 = scmp.eq.s32.totalorder %s13, 0
    %p55 = por %p53, %p54
    %p56 = scmp.ne.s32.totalorder %s44, %s45
    %p57 = scmp.eq.s32.totalorder %s14, 2
    %p58 = por %p56, %p57
    %p60 = scmp.ne.s32.totalorder %s45, %s59
    %p61 = scmp.eq.s32.totalorder %s14, 0
    %p62 = por %p60, %p61
    %s63 = ssub.s32 %s8, %s15
    %p64 = scmp.eq.s32.totalorder %s63, 0
    %s66 = sadd.s32 %s65, 1
    %s67 = scalar_select %p64, %s65, %s66
    %p70 = pneg %p64
    %p71 = scmp.eq.s32.totalorder %s8, 2
    %p72 = por %p70, %p71
    %p73 = scmp.ne.s32.totalorder %s65, %s68
    %p74 = scmp.eq.s32.totalorder %s8, 0
    %p75 = por %p73, %p74
    %p76 = scmp.ne.s32.totalorder %s65, %s68
    %p77 = scmp.eq.s32.totalorder %s13, 2
    %p78 = por %p76, %p77
    %p79 = scmp.ne.s32.totalorder %s68, %s69
    %p80 = scmp.eq.s32.totalorder %s13, 0
    %p81 = por %p79, %p80
    %p82 = scmp.ne.s32.totalorder %s68, %s69
    %p83 = scmp.eq.s32.totalorder %s14, 2
    %p84 = por %p82, %p83
    %p86 = scmp.ne.s32.totalorder %s69, %s85
    %p87 = scmp.eq.s32.totalorder %s14, 0
    %p88 = por %p86, %p87
    %p89 = scmp.le.s32.totalorder 1, %s8
    %p90 = scmp.lt.s32.totalorder %s8, 4
    %p91 = pnand %p89, %p90
    %p92 = pneg %p91
    // Predicated region
    $region9: #{gcn_forward.4} parent=5 // pred_check
      _
    $region10: #{gcn_forward.4} parent=5 // pred_check_branch
      %94 = sbr.rel (%p91) target = $region12
    $region11: #{gcn_forward.4} parent=5 // pred_region
      %s95 = ssub.s32 %s8, 1
      // Predicated region
      $region13: #{gcn_forward.4} parent=11 // pred_check
        %p96 = pneg %p55
      $region14: #{gcn_forward.4} parent=11 // pred_check_branch
        %98 = sbr.rel (%p96) target = $region16
      $region15: #{gcn_forward.4} parent=11 // pred_region
        _
      $region16: #{gcn_forward.4} parent=11 // pred_fallthru
        _
    $region12: #{gcn_forward.4} parent=5 // pred_fallthru
      _
    %p99 = scmp.lt.s32.totalorder %s8, 3
    // Predicated region
    $region17: #{gcn_forward.4} parent=5 // pred_check
      %p100 = pneg %p99
    $region18: #{gcn_forward.4} parent=5 // pred_check_branch
      %102 = sbr.rel (%p100) target = $region20
    $region19: #{gcn_forward.4} parent=5 // pred_region
      // Predicated region
      $region21: #{gcn_forward.4} parent=19 // pred_check
        %p103 = pneg %p28
      $region22: #{gcn_forward.4} parent=19 // pred_check_branch
        %105 = sbr.rel (%p103) target = $region24
      $region23: #{gcn_forward.4} parent=19 // pred_region
        %s106 = smul.u32 16, %s8
        %p107 = scmp.lt.s32.totalorder %s106, 47
        %s108 = scalar_select %p107, %s106, 47
        %s109 = smul.addr %s108, 8
        %s110 = scalar_lea.vmem %s0, %s109
        %s111 = smul.u32 16, %s8
      $region24: #{gcn_forward.4} parent=19 // pred_fallthru
        _
    $region20: #{gcn_forward.4} parent=5 // pred_fallthru
      _
    %p112 = scmp.le.s32.totalorder 1, %s8
    %p113 = scmp.lt.s32.totalorder %s8, 4
    %p114 = pnand %p112, %p113
    %p115 = pneg %p114
    // Predicated region
    $region25: #{gcn_forward.4} parent=5 // pred_check
      _
    $region26: #{gcn_forward.4} parent=5 // pred_check_branch
      %117 = sbr.rel (%p114) target = $region28
    $region27: #{gcn_forward.4} parent=5 // pred_region
      %s118 = ssub.s32 %s8, 1
      %s119 = smul.u32 16, %s13
      %p120 = scmp.lt.s32.totalorder %s119, 47
      %s121 = scalar_select %p120, %s119, 47
      %s122 = smul.addr %s121, 8
      %s123 = scalar_lea.vmem %s0, %s122
      %p124 = pneg %p34
      %p125 = pneg %p31
      %p126 = pneg %p55
      %p127 = pneg %p52
      %p128 = pneg %p81
      %p129 = pneg %p78
      %s130 = smul.u32 16, %s13
      %p131 = scmp.lt.s32.totalorder %s130, 47
      %s132 = scalar_select %p131, %s130, 47
      %s133 = smul.addr %s132, 4
      %s134 = scalar_lea.vmem %s2, %s133
      %s135 = smul.u32 16, %s13
      %p136 = scmp.lt.s32.totalorder %s135, 47
      %s137 = scalar_select %p136, %s135, 47
      %s138 = smul.addr %s137, 8
      %s139 = scalar_lea.vmem %s0, %s138
      %s140 = smul.u32 16, %s13
      %s141 = smul.u32 16, %s13
      %p142 = scmp.lt.s32.totalorder %s141, 47
      %s143 = scalar_select %p142, %s141, 47
      %s144 = smul.addr %s143, 4
      %s145 = scalar_lea.vmem %s2, %s144
      %s146 = smul.u32 16, %s13
      %v147 = vld [vmem:[%s139] sm:$0xff]
      %v148 = vld [vmem:[%s139 + $0x8] sm:$0xff]
      %v149 = vld [vmem:[%s139 + $0x10] sm:$0xff]
      %v150 = vld [vmem:[%s139 + $0x18] sm:$0xff]
      %v151 = vld [vmem:[%s139 + $0x20] sm:$0xff]
      %v152 = vld [vmem:[%s139 + $0x28] sm:$0xff]
      %v153 = vld [vmem:[%s139 + $0x30] sm:$0xff]
      %v154 = vld [vmem:[%s139 + $0x38] sm:$0xff]
      %v155 = vld [vmem:[%s139 + $0x40] sm:$0xff]
      %v156 = vld [vmem:[%s139 + $0x48] sm:$0xff]
      %v157 = vld [vmem:[%s139 + $0x50] sm:$0xff]
      %v158 = vld [vmem:[%s139 + $0x58] sm:$0xff]
      %v159 = vld [vmem:[%s139 + $0x60] sm:$0xff]
      %v160 = vld [vmem:[%s139 + $0x68] sm:$0xff]
      %v161 = vld [vmem:[%s139 + $0x70] sm:$0xff]
      %v162 = vld [vmem:[%s139 + $0x78] sm:$0xff]
      %v163 = vld [vmem:[%s1] sm:$0xff]
      %v164 = vld [vmem:[%s1 + $0x8] sm:$0xff]
      %v165 = vld [vmem:[%s1 + $0x10] sm:$0xff]
      %v166 = vld [vmem:[%s1 + $0x18] sm:$0xff]
      %v167 = vld [vmem:[%s1 + $0x20] sm:$0xff]
      %v168 = vld [vmem:[%s1 + $0x28] sm:$0xff]
      %v169 = vld [vmem:[%s1 + $0x30] sm:$0xff]
      %v170 = vld [vmem:[%s1 + $0x38] sm:$0xff]
      %v171 = vld [vmem:[%s1 + $0x40] sm:$0xff]
      %v172 = vld [vmem:[%s1 + $0x48] sm:$0xff]
      %v173 = vld [vmem:[%s1 + $0x50] sm:$0xff]
      %v174 = vld [vmem:[%s1 + $0x58] sm:$0xff]
      %v175 = vld [vmem:[%s1 + $0x60] sm:$0xff]
      %v176 = vld [vmem:[%s1 + $0x68] sm:$0xff]
      %v177 = vld [vmem:[%s1 + $0x70] sm:$0xff]
      %v178 = vld [vmem:[%s1 + $0x78] sm:$0xff]
      %179 = vmatpush.msra.mxu0 %v178
      %180 = vmatpush.msra.mxu0 %v177
      %181 = vmatpush.msra.mxu0 %v176
      %182 = vmatpush.msra.mxu0 %v175
      %183 = vmatpush.msra.mxu0 %v174
      %184 = vmatpush.msra.mxu0 %v173
      %185 = vmatpush.msra.mxu0 %v172
      %186 = vmatpush.msra.mxu0 %v171
      %187 = vmatpush.msra.mxu0 %v170
      %188 = vmatpush.msra.mxu0 %v169
      %189 = vmatpush.msra.mxu0 %v168
      %190 = vmatpush.msra.mxu0 %v167
      %191 = vmatpush.msra.mxu0 %v166
      %192 = vmatpush.msra.mxu0 %v165
      %193 = vmatpush.msra.mxu0 %v164
      %194 = vmatpush.msra.mxu0 %v163
      %195 = vmatmul.f32.gmra.mxu0 %v147
      %v196 = vpop.f32.mrf.mxu0
      %v197 = vadd.f32 0.0, %v196
      %198 = vmatmul.f32.gmra.mxu0 %v148
      %v199 = vpop.f32.mrf.mxu0
      %v200 = vadd.f32 0.0, %v199
      %201 = vmatmul.f32.gmra.mxu0 %v149
      %v202 = vpop.f32.mrf.mxu0
      %v203 = vadd.f32 0.0, %v202
      %204 = vmatmul.f32.gmra.mxu0 %v150
      %v205 = vpop.f32.mrf.mxu0
      %v206 = vadd.f32 0.0, %v205
      %207 = vmatmul.f32.gmra.mxu0 %v151
      %v208 = vpop.f32.mrf.mxu0
      %v209 = vadd.f32 0.0, %v208
      %210 = vmatmul.f32.gmra.mxu0 %v152
      %v211 = vpop.f32.mrf.mxu0
      %v212 = vadd.f32 0.0, %v211
      %213 = vmatmul.f32.gmra.mxu0 %v153
      %v214 = vpop.f32.mrf.mxu0
      %v215 = vadd.f32 0.0, %v214
      %216 = vmatmul.f32.gmra.mxu0 %v154
      %v217 = vpop.f32.mrf.mxu0
      %v218 = vadd.f32 0.0, %v217
      %219 = vmatmul.f32.gmra.mxu0 %v155
      %v220 = vpop.f32.mrf.mxu0
      %v221 = vadd.f32 0.0, %v220
      %222 = vmatmul.f32.gmra.mxu0 %v156
      %v223 = vpop.f32.mrf.mxu0
      %v224 = vadd.f32 0.0, %v223
      %225 = vmatmul.f32.gmra.mxu0 %v157
      %v226 = vpop.f32.mrf.mxu0
      %v227 = vadd.f32 0.0, %v226
      %228 = vmatmul.f32.gmra.mxu0 %v158
      %v229 = vpop.f32.mrf.mxu0
      %v230 = vadd.f32 0.0, %v229
      %231 = vmatmul.f32.gmra.mxu0 %v159
      %v232 = vpop.f32.mrf.mxu0
      %v233 = vadd.f32 0.0, %v232
      %234 = vmatmul.f32.gmra.mxu0 %v160
      %v235 = vpop.f32.mrf.mxu0
      %v236 = vadd.f32 0.0, %v235
      %237 = vmatmul.f32.gmra.mxu0 %v161
      %v238 = vpop.f32.mrf.mxu0
      %v239 = vadd.f32 0.0, %v238
      %240 = vmatmul.f32.gmra.mxu0 %v162
      %v241 = vpop.f32.mrf.mxu0
      %v242 = vadd.f32 0.0, %v241
      %243 = vdwg.mxu0
      %v244 = vpack.c.bf16 %v197, %v197
      %v245 = vpack.c.bf16 %v200, %v200
      %v246 = vpack.c.bf16 %v203, %v203
      %v247 = vpack.c.bf16 %v206, %v206
      %v248 = vpack.c.bf16 %v209, %v209
      %v249 = vpack.c.bf16 %v212, %v212
      %v250 = vpack.c.bf16 %v215, %v215
      %v251 = vpack.c.bf16 %v218, %v218
      %v252 = vpack.c.bf16 %v221, %v221
      %v253 = vpack.c.bf16 %v224, %v224
      %v254 = vpack.c.bf16 %v227, %v227
      %v255 = vpack.c.bf16 %v230, %v230
      %v256 = vpack.c.bf16 %v233, %v233
      %v257 = vpack.c.bf16 %v236, %v236
      %v258 = vpack.c.bf16 %v239, %v239
      %v259 = vpack.c.bf16 %v242, %v242
      %260 = vst [vmem:[%s145] sm:$0xf] %v244
      %261 = vst [vmem:[%s145 + $0x4] sm:$0xf] %v245
      %262 = vst [vmem:[%s145 + $0x8] sm:$0xf] %v246
      %263 = vst [vmem:[%s145 + $0xc] sm:$0xf] %v247
      %264 = vst [vmem:[%s145 + $0x10] sm:$0xf] %v248
      %265 = vst [vmem:[%s145 + $0x14] sm:$0xf] %v249
      %266 = vst [vmem:[%s145 + $0x18] sm:$0xf] %v250
      %267 = vst [vmem:[%s145 + $0x1c] sm:$0xf] %v251
      %268 = vst [vmem:[%s145 + $0x20] sm:$0xf] %v252
      %269 = vst [vmem:[%s145 + $0x24] sm:$0xf] %v253
      %270 = vst [vmem:[%s145 + $0x28] sm:$0xf] %v254
      %271 = vst [vmem:[%s145 + $0x2c] sm:$0xf] %v255
      %272 = vst [vmem:[%s145 + $0x30] sm:$0xf] %v256
      %273 = vst [vmem:[%s145 + $0x34] sm:$0xf] %v257
      %274 = vst [vmem:[%s145 + $0x38] sm:$0xf] %v258
      %275 = vst [vmem:[%s145 + $0x3c] sm:$0xf] %v259
      %s276 = smul.u32 16, %s13
      %p277 = scmp.lt.s32.totalorder %s276, 47
      %s278 = scalar_select %p277, %s276, 47
      %s279 = smul.addr %s278, 4
      %s280 = scalar_lea.vmem %s2, %s279
      // Predicated region
      $region29: #{gcn_forward.4} parent=27 // pred_check
        %p281 = pneg %p78
      $region30: #{gcn_forward.4} parent=27 // pred_check_branch
        %283 = sbr.rel (%p281) target = $region32
      $region31: #{gcn_forward.4} parent=27 // pred_region
        %s284 = smul.u32 16, %s13
      $region32: #{gcn_forward.4} parent=27 // pred_fallthru
        _
    $region28: #{gcn_forward.4} parent=5 // pred_fallthru
      _
    %p285 = scmp.le.s32.totalorder 2, %s8
    // Predicated region
    $region33: #{gcn_forward.4} parent=5 // pred_check
      %p286 = pneg %p285
    $region34: #{gcn_forward.4} parent=5 // pred_check_branch
      %288 = sbr.rel (%p286) target = $region36
    $region35: #{gcn_forward.4} parent=5 // pred_region
      %s289 = ssub.s32 %s8, 2
      // Predicated region
      $region37: #{gcn_forward.4} parent=35 // pred_check
        %p290 = pneg %p84
      $region38: #{gcn_forward.4} parent=35 // pred_check_branch
        %292 = sbr.rel (%p290) target = $region40
      $region39: #{gcn_forward.4} parent=35 // pred_region
        %s293 = smul.u32 16, %s14
        %p294 = scmp.lt.s32.totalorder %s293, 47
        %s295 = scalar_select %p294, %s293, 47
        %s296 = smul.addr %s295, 4
        %s297 = scalar_lea.vmem %s2, %s296
      $region40: #{gcn_forward.4} parent=35 // pred_fallthru
        _
    $region36: #{gcn_forward.4} parent=5 // pred_fallthru
      _
  $region6: #{gcn_forward.4} parent=0 // loop_footer
    %s12 = sadd.s32 1, %s8
  $region7: #{gcn_forward.4} parent=0 // loop_footer_branch
    %7 = sbr.rel target = $region3
  $region8: #{gcn_forward.4} parent=0 // loop_exit
    _

// kernel: gcn_forward.5
$region0: #{gcn_forward.5}
  #allocation0 [shape = 'u32[]', space=smem, size = 0x4, offset = 0x4, fixed_abs, tag = 'smem constant byte address 0x4 - core index']
  #allocation1 [shape = 'u32[72,128]{1,0:T(1,128)}', space=vmem, size = 0x9000, scoped, tag = 'internal scratch']
  #allocation2 [shape = 'f32[128,128]{1,0:T(8,128)}', space=vmem, size = 0x10000, scoped, tag = 'scratch operand']
  %s0 = inlined_call_operand.vmem [shape: bf16[384,384], index: 0, kind: input, shape index: {}]
  %s1 = inlined_call_operand.vmem [shape: bf16[384,128], index: 1, kind: input, shape index: {}]
  %s2 = inlined_call_operand.vmem [shape: f32[1,128], index: 2, kind: input, shape index: {}]
  %s3 = inlined_call_operand.vmem [shape: bf16[384,128], index: 3, kind: output, shape index: {}]
  %s4 = sld [smem:[#allocation0]]
  $region94: #{gcn_forward.5} parent=0
    _
  %s6 = ssub.s32 1, %s4
  %s7 = scalar_select 0, %s6, %s4
  $region1: #{gcn_forward.5} parent=0
    #allocation3 [shape = 'u8[65536]{0}', space=vmem, size = 0x10000, scoped, tag = 'input window, operand 0']
    loop: start=0, step=1, limit=11
    $region2: #{gcn_forward.5} parent=1 // loop_pre_header
      _
    $region3: #{gcn_forward.5} parent=1 // loop_header
      %s9 = sphi 0, %s13
      %p10 = scmp.ge.s32.totalorder %s9, 11
      %s16 = sphi 0, %s28
      %s17 = sphi 0, %s24
      %s18 = sphi 0, %s16
      %s19 = sphi 0, %s17
      %s20 = sphi 0, %s18
      %s21 = sphi 0, %s19
      %s33 = sphi 0, %s35
      %s36 = sphi 0, %s33
      %s37 = sphi 0, %s36
      %s53 = sphi 0, %s37
      %s59 = sphi 0, %s61
      %s62 = sphi 0, %s59
      %s63 = sphi 0, %s62
      %s79 = sphi 0, %s63
      %s83 = sphi 0, %s83
      %s85 = sphi 0, %s83
      %s86 = sphi 0, %s85
      %s100 = sphi 0, %s86
      %s106 = sphi 0, %s108
      %s109 = sphi 0, %s106
      %s110 = sphi 0, %s109
      %s126 = sphi 0, %s110
    $region4: #{gcn_forward.5} parent=1 // loop_header_branch
      %12 = sbr.rel (%p10) target = $region8
    $region5: #{gcn_forward.5} parent=1 // loop_body
      %s14 = ssub.s32 %s9, 1
      %s15 = ssub.s32 %s9, 2
      %s22 = sadd.s32 1, %s17
      %p23 = scmp.ge.s32.totalorder %s22, 3
      %s24 = scalar_select %p23, 0, %s22
      %s25 = sadd.s32 1, %s16
      %s26 = scalar_select %p23, %s25, %s16
      %p27 = scmp.ge.s32.totalorder %s26, 3
      %s28 = scalar_select %p27, 0, %s26
      %s29 = ssub.s32 %s16, %s28
      %s30 = ssub.s32 %s17, %s24
      %s31 = sor.u32 %s29, %s30
      %p32 = scmp.eq.s32.totalorder %s31, 0
      %s34 = sadd.s32 %s33, 1
      %s35 = scalar_select %p32, %s33, %s34
      %p38 = pneg %p32
      %p39 = scmp.eq.s32.totalorder %s9, 8
      %p40 = por %p38, %p39
      %p41 = scmp.ne.s32.totalorder %s33, %s36
      %p42 = scmp.eq.s32.totalorder %s9, 0
      %p43 = por %p41, %p42
      %p44 = scmp.ne.s32.totalorder %s33, %s36
      %p45 = scmp.eq.s32.totalorder %s14, 8
      %p46 = por %p44, %p45
      %p47 = scmp.ne.s32.totalorder %s36, %s37
      %p48 = scmp.eq.s32.totalorder %s14, 0
      %p49 = por %p47, %p48
      %p50 = scmp.ne.s32.totalorder %s36, %s37
      %p51 = scmp.eq.s32.totalorder %s15, 8
      %p52 = por %p50, %p51
      %p54 = scmp.ne.s32.totalorder %s37, %s53
      %p55 = scmp.eq.s32.totalorder %s15, 0
      %p56 = por %p54, %p55
      %s57 = ssub.s32 %s17, %s24
      %p58 = scmp.eq.s32.totalorder %s57, 0
      %s60 = sadd.s32 %s59, 1
      %s61 = scalar_select %p58, %s59, %s60
      %p64 = pneg %p58
      %p65 = scmp.eq.s32.totalorder %s9, 8
      %p66 = por %p64, %p65
      %p67 = scmp.ne.s32.totalorder %s59, %s62
      %p68 = scmp.eq.s32.totalorder %s9, 0
      %p69 = por %p67, %p68
      %p70 = scmp.ne.s32.totalorder %s59, %s62
      %p71 = scmp.eq.s32.totalorder %s14, 8
      %p72 = por %p70, %p71
      %p73 = scmp.ne.s32.totalorder %s62, %s63
      %p74 = scmp.eq.s32.totalorder %s14, 0
      %p75 = por %p73, %p74
      %p76 = scmp.ne.s32.totalorder %s62, %s63
      %p77 = scmp.eq.s32.totalorder %s15, 8
      %p78 = por %p76, %p77
      %p80 = scmp.ne.s32.totalorder %s63, %s79
      %p81 = scmp.eq.s32.totalorder %s15, 0
      %p82 = por %p80, %p81
      %s84 = sadd.s32 %s83, 1
      %p87 = scmp.eq.s32.totalorder %s9, 8
      %p88 = scmp.ne.s32.totalorder %s83, %s85
      %p89 = scmp.eq.s32.totalorder %s9, 0
      %p90 = por %p88, %p89
      %p91 = scmp.ne.s32.totalorder %s83, %s85
      %p92 = scmp.eq.s32.totalorder %s14, 8
      %p93 = por %p91, %p92
      %p94 = scmp.ne.s32.totalorder %s85, %s86
      %p95 = scmp.eq.s32.totalorder %s14, 0
      %p96 = por %p94, %p95
      %p97 = scmp.ne.s32.totalorder %s85, %s86
      %p98 = scmp.eq.s32.totalorder %s15, 8
      %p99 = por %p97, %p98
      %p101 = scmp.ne.s32.totalorder %s86, %s100
      %p102 = scmp.eq.s32.totalorder %s15, 0
      %p103 = por %p101, %p102
      %s104 = ssub.s32 %s16, %s28
      %p105 = scmp.eq.s32.totalorder %s104, 0
      %s107 = sadd.s32 %s106, 1
      %s108 = scalar_select %p105, %s106, %s107
      %p111 = pneg %p105
      %p112 = scmp.eq.s32.totalorder %s9, 8
      %p113 = por %p111, %p112
      %p114 = scmp.ne.s32.totalorder %s106, %s109
      %p115 = scmp.eq.s32.totalorder %s9, 0
      %p116 = por %p114, %p115
      %p117 = scmp.ne.s32.totalorder %s106, %s109
      %p118 = scmp.eq.s32.totalorder %s14, 8
      %p119 = por %p117, %p118
      %p120 = scmp.ne.s32.totalorder %s109, %s110
      %p121 = scmp.eq.s32.totalorder %s14, 0
      %p122 = por %p120, %p121
      %p123 = scmp.ne.s32.totalorder %s109, %s110
      %p124 = scmp.eq.s32.totalorder %s15, 8
      %p125 = por %p123, %p124
      %p127 = scmp.ne.s32.totalorder %s110, %s126
      %p128 = scmp.eq.s32.totalorder %s15, 0
      %p129 = por %p127, %p128
      %p130 = scmp.le.s32.totalorder 1, %s9
      %p131 = scmp.lt.s32.totalorder %s9, 10
      %p132 = pnand %p130, %p131
      %p133 = pneg %p132
      // Predicated region
      $region9: #{gcn_forward.5} parent=5 // pred_check
        _
      $region10: #{gcn_forward.5} parent=5 // pred_check_branch
        %135 = sbr.rel (%p132) target = $region12
      $region11: #{gcn_forward.5} parent=5 // pred_region
        %s136 = ssub.s32 %s9, 1
        // Predicated region
        $region13: #{gcn_forward.5} parent=11 // pred_check
          %p137 = pneg %p96
        $region14: #{gcn_forward.5} parent=11 // pred_check_branch
          %139 = sbr.rel (%p137) target = $region16
        $region15: #{gcn_forward.5} parent=11 // pred_region
          _
        $region16: #{gcn_forward.5} parent=11 // pred_fallthru
          _
      $region12: #{gcn_forward.5} parent=5 // pred_fallthru
        _
      %p140 = scmp.lt.s32.totalorder %s9, 9
      // Predicated region
      $region17: #{gcn_forward.5} parent=5 // pred_check
        %p141 = pneg %p140
      $region18: #{gcn_forward.5} parent=5 // pred_check_branch
        %143 = sbr.rel (%p141) target = $region20
      $region19: #{gcn_forward.5} parent=5 // pred_region
        // Predicated region
        $region21: #{gcn_forward.5} parent=19 // pred_check
          %p144 = pneg %p43
        $region22: #{gcn_forward.5} parent=19 // pred_check_branch
          %146 = sbr.rel (%p144) target = $region24
        $region23: #{gcn_forward.5} parent=19 // pred_region
          %s147 = sand.u32 %s33, 1
          %s148 = sand.u32 %s33, 1
          %s149 = smul.addr %s148, 64
          %s150 = scalar_lea.vmem [#allocation3], %s149
          %s151 = smul.u32 16, %s16
          %s152 = smul.addr %s151, 3
          %s153 = sadd.s32 %s17, %s152
          %s154 = smul.addr %s153, 4
          %s155 = scalar_lea.vmem %s0, %s154
          // Predicated region
          $region25: #{gcn_forward.5} parent=23 // pred_check
            _
          $region26: #{gcn_forward.5} parent=23 // pred_check_branch
            %157 = sbr.rel (0) target = $region28
          $region27: #{gcn_forward.5} parent=23 // pred_region
            // Predicated region
            $region29: #{gcn_forward.5} parent=27 // pred_check
              _
            $region30: #{gcn_forward.5} parent=27 // pred_check_branch
              %159 = sbr.rel target = $region32
            $region31: #{gcn_forward.5} parent=27 // pred_region
              // Predicated region
              $region44: #{gcn_forward.5} parent=31 // pred_check
                _
              $region45: #{gcn_forward.5} parent=31 // pred_check_branch
                %205 = sbr.rel (0) target = $region47
              $region46: #{gcn_forward.5} parent=31 // pred_region
                loop: start=0, step=1, limit=1
                $region48: #{gcn_forward.5} parent=46 // loop_pre_header
                  _
                $region49: #{gcn_forward.5} parent=46 // loop_header
                  %s207 = sphi 0, %s211
                  %p208 = scmp.ge.s32.totalorder %s207, 1
                  %s212 = sphi %s155, %s155
                  %s213 = sphi %s150, %s150
                $region50: #{gcn_forward.5} parent=46 // loop_header_branch
                  %210 = sbr.rel (%p208) target = $region54
                $region51: #{gcn_forward.5} parent=46 // loop_body
                  _
                $region52: #{gcn_forward.5} parent=46 // loop_footer
                  %s211 = sadd.s32 1, %s207
                $region53: #{gcn_forward.5} parent=46 // loop_footer_branch
                  %206 = sbr.rel target = $region49
                $region54: #{gcn_forward.5} parent=46 // loop_exit
                  _
                %s215 = ssub.s32 16, 1
                loop: start=0, step=1, limit=1
                $region55: #{gcn_forward.5} parent=46 // loop_pre_header
                  _
                $region56: #{gcn_forward.5} parent=46 // loop_header
                  %s217 = sphi 0, %s221
                  %p218 = scmp.ge.s32.totalorder %s217, 1
                  %s222 = sphi %s155, %s155
                  %s223 = sphi %s150, %s150
                $region57: #{gcn_forward.5} parent=46 // loop_header_branch
                  %220 = sbr.rel (%p218) target = $region61
                $region58: #{gcn_forward.5} parent=46 // loop_body
                  %v224 = vld [vmem:[%s222] sm:%s215]
                  %225 = vst [vmem:[%s223] sm:%s215] %v224
                  %v226 = vld [vmem:[%s222 + $0xc] sm:%s215]
                  %227 = vst [vmem:[%s223 + $0x4] sm:%s215] %v226
                  %v228 = vld [vmem:[%s222 + $0x18] sm:%s215]
                  %229 = vst [vmem:[%s223 + $0x8] sm:%s215] %v228
                  %v230 = vld [vmem:[%s222 + $0x24] sm:%s215]
                  %231 = vst [vmem:[%s223 + $0xc] sm:%s215] %v230
                  %v232 = vld [vmem:[%s222 + $0x30] sm:%s215]
                  %233 = vst [vmem:[%s223 + $0x10] sm:%s215] %v232
                  %v234 = vld [vmem:[%s222 + $0x3c] sm:%s215]
                  %235 = vst [vmem:[%s223 + $0x14] sm:%s215] %v234
                  %v236 = vld [vmem:[%s222 + $0x48] sm:%s215]
                  %237 = vst [vmem:[%s223 + $0x18] sm:%s215] %v236
                  %v238 = vld [vmem:[%s222 + $0x54] sm:%s215]
                  %239 = vst [vmem:[%s223 + $0x1c] sm:%s215] %v238
                  %v240 = vld [vmem:[%s222 + $0x60] sm:%s215]
                  %241 = vst [vmem:[%s223 + $0x20] sm:%s215] %v240
                  %v242 = vld [vmem:[%s222 + $0x6c] sm:%s215]
                  %243 = vst [vmem:[%s223 + $0x24] sm:%s215] %v242
                  %v244 = vld [vmem:[%s222 + $0x78] sm:%s215]
                  %245 = vst [vmem:[%s223 + $0x28] sm:%s215] %v244
                  %v246 = vld [vmem:[%s222 + $0x84] sm:%s215]
                  %247 = vst [vmem:[%s223 + $0x2c] sm:%s215] %v246
                  %v248 = vld [vmem:[%s222 + $0x90] sm:%s215]
                  %249 = vst [vmem:[%s223 + $0x30] sm:%s215] %v248
                  %v250 = vld [vmem:[%s222 + $0x9c] sm:%s215]
                  %251 = vst [vmem:[%s223 + $0x34] sm:%s215] %v250
                  %v252 = vld [vmem:[%s222 + $0xa8] sm:%s215]
                  %253 = vst [vmem:[%s223 + $0x38] sm:%s215] %v252
                  %v254 = vld [vmem:[%s222 + $0xb4] sm:%s215]
                  %255 = vst [vmem:[%s223 + $0x3c] sm:%s215] %v254
                $region59: #{gcn_forward.5} parent=46 // loop_footer
                  %s221 = sadd.s32 1, %s217
                $region60: #{gcn_forward.5} parent=46 // loop_footer_branch
                  %216 = sbr.rel target = $region56
                $region61: #{gcn_forward.5} parent=46 // loop_exit
                  _
              $region47: #{gcn_forward.5} parent=31 // pred_fallthru
                _
            $region32: #{gcn_forward.5} parent=27 // pred_fallthru
              _
            // Predicated region
            $region33: #{gcn_forward.5} parent=27 // pred_check
              _
            $region34: #{gcn_forward.5} parent=27 // pred_check_branch
              %161 = sbr.rel (0) target = $region36
            $region35: #{gcn_forward.5} parent=27 // pred_region
              %s163 = ssub.s32 16, 1
              loop: start=0, step=1, limit=1
              $region37: #{gcn_forward.5} parent=35 // loop_pre_header
                _
              $region38: #{gcn_forward.5} parent=35 // loop_header
                %s165 = sphi 0, %s169
                %p166 = scmp.ge.s32.totalorder %s165, 1
                %s170 = sphi %s155, %s155
                %s171 = sphi %s150, %s150
              $region39: #{gcn_forward.5} parent=35 // loop_header_branch
                %168 = sbr.rel (%p166) target = $region43
              $region40: #{gcn_forward.5} parent=35 // loop_body
                %v172 = vld [vmem:[%s170] sm:%s163]
                %173 = vst [vmem:[%s171] sm:%s163] %v172
                %v174 = vld [vmem:[%s170 + $0xc] sm:%s163]
                %175 = vst [vmem:[%s171 + $0x4] sm:%s163] %v174
                %v176 = vld [vmem:[%s170 + $0x18] sm:%s163]
                %177 = vst [vmem:[%s171 + $0x8] sm:%s163] %v176
                %v178 = vld [vmem:[%s170 + $0x24] sm:%s163]
                %179 = vst [vmem:[%s171 + $0xc] sm:%s163] %v178
                %v180 = vld [vmem:[%s170 + $0x30] sm:%s163]
                %181 = vst [vmem:[%s171 + $0x10] sm:%s163] %v180
                %v182 = vld [vmem:[%s170 + $0x3c] sm:%s163]
                %183 = vst [vmem:[%s171 + $0x14] sm:%s163] %v182
                %v184 = vld [vmem:[%s170 + $0x48] sm:%s163]
                %185 = vst [vmem:[%s171 + $0x18] sm:%s163] %v184
                %v186 = vld [vmem:[%s170 + $0x54] sm:%s163]
                %187 = vst [vmem:[%s171 + $0x1c] sm:%s163] %v186
                %v188 = vld [vmem:[%s170 + $0x60] sm:%s163]
                %189 = vst [vmem:[%s171 + $0x20] sm:%s163] %v188
                %v190 = vld [vmem:[%s170 + $0x6c] sm:%s163]
                %191 = vst [vmem:[%s171 + $0x24] sm:%s163] %v190
                %v192 = vld [vmem:[%s170 + $0x78] sm:%s163]
                %193 = vst [vmem:[%s171 + $0x28] sm:%s163] %v192
                %v194 = vld [vmem:[%s170 + $0x84] sm:%s163]
                %195 = vst [vmem:[%s171 + $0x2c] sm:%s163] %v194
                %v196 = vld [vmem:[%s170 + $0x90] sm:%s163]
                %197 = vst [vmem:[%s171 + $0x30] sm:%s163] %v196
                %v198 = vld [vmem:[%s170 + $0x9c] sm:%s163]
                %199 = vst [vmem:[%s171 + $0x34] sm:%s163] %v198
                %v200 = vld [vmem:[%s170 + $0xa8] sm:%s163]
                %201 = vst [vmem:[%s171 + $0x38] sm:%s163] %v200
                %v202 = vld [vmem:[%s170 + $0xb4] sm:%s163]
                %203 = vst [vmem:[%s171 + $0x3c] sm:%s163] %v202
              $region41: #{gcn_forward.5} parent=35 // loop_footer
                %s169 = sadd.s32 1, %s165
              $region42: #{gcn_forward.5} parent=35 // loop_footer_branch
                %164 = sbr.rel target = $region38
              $region43: #{gcn_forward.5} parent=35 // loop_exit
                _
            $region36: #{gcn_forward.5} parent=27 // pred_fallthru
              _
          $region28: #{gcn_forward.5} parent=23 // pred_fallthru
            _
          %256 = vnop
        $region24: #{gcn_forward.5} parent=19 // pred_fallthru
          _
        // Predicated region
        $region62: #{gcn_forward.5} parent=19 // pred_check
          %p257 = pneg %p69
        $region63: #{gcn_forward.5} parent=19 // pred_check_branch
          %259 = sbr.rel (%p257) target = $region65
        $region64: #{gcn_forward.5} parent=19 // pred_region
          %s260 = smul.u32 16, %s17
          %p261 = scmp.lt.s32.totalorder %s260, 47
          %s262 = scalar_select %p261, %s260, 47
          %s263 = smul.addr %s262, 4
          %s264 = scalar_lea.vmem %s1, %s263
          %s265 = smul.u32 16, %s17
        $region65: #{gcn_forward.5} parent=19 // pred_fallthru
          _
      $region20: #{gcn_forward.5} parent=5 // pred_fallthru
        _
      %p266 = scmp.le.s32.totalorder 1, %s9
      %p267 = scmp.lt.s32.totalorder %s9, 10
      %p268 = pnand %p266, %p267
      %p269 = pneg %p268
      // Predicated region
      $region66: #{gcn_forward.5} parent=5 // pred_check
        _
      $region67: #{gcn_forward.5} parent=5 // pred_check_branch
        %271 = sbr.rel (%p268) target = $region69
      $region68: #{gcn_forward.5} parent=5 // pred_region
        %s272 = ssub.s32 %s9, 1
        %s273 = sand.u32 %s36, 1
        %s274 = sand.u32 %s36, 1
        %s275 = smul.addr %s274, 64
        %s276 = scalar_lea.vmem [#allocation3], %s275
        // Predicated region
        $region70: #{gcn_forward.5} parent=68 // pred_check
          %p277 = pneg %p49
        $region71: #{gcn_forward.5} parent=68 // pred_check_branch
          %279 = sbr.rel (%p277) target = $region73
        $region72: #{gcn_forward.5} parent=68 // pred_region
          _
        $region73: #{gcn_forward.5} parent=68 // pred_fallthru
          _
        %s280 = sand.u32 %s36, 1
        %s281 = sand.u32 %s36, 1
        %s282 = smul.addr %s281, 64
        %s283 = scalar_lea.vmem [#allocation3], %s282
        %p284 = pneg %p49
        %p285 = pneg %p46
        %s286 = smul.u32 16, %s19
        %p287 = scmp.lt.s32.totalorder %s286, 47
        %s288 = scalar_select %p287, %s286, 47
        %s289 = smul.addr %s288, 4
        %s290 = scalar_lea.vmem %s1, %s289
        %p291 = pneg %p75
        %p292 = pneg %p72
        %p293 = pneg %p96
        %p294 = pneg %p93
        %p295 = pneg %p122
        %p296 = pneg %p119
        %s297 = smul.u32 16, %s18
        %p298 = scmp.lt.s32.totalorder %s297, 47
        %s299 = scalar_select %p298, %s297, 47
        %s300 = smul.addr %s299, 4
        %s301 = scalar_lea.vmem %s3, %s300
        %s302 = smul.u32 16, %s18
        %s303 = smul.u32 16, %s19
        %p304 = scmp.lt.s32.totalorder %s303, 47
        %s305 = scalar_select %p304, %s303, 47
        %s306 = smul.addr %s305, 4
        %s307 = scalar_lea.vmem %s1, %s306
        %s308 = smul.u32 16, %s19
        %s309 = smul.u32 16, %s18
        %p310 = scmp.lt.s32.totalorder %s309, 47
        %s311 = scalar_select %p310, %s309, 47
        %s312 = smul.addr %s311, 4
        %s313 = scalar_lea.vmem %s3, %s312
        %s314 = smul.u32 16, %s18
        %p315 = scmp.eq.s32.totalorder %s19, 0
        // Predicated region
        $region74: #{gcn_forward.5} parent=68 // pred_check
          %p316 = pneg %p315
        $region75: #{gcn_forward.5} parent=68 // pred_check_branch
          %318 = sbr.rel (%p316) target = $region77
        $region76: #{gcn_forward.5} parent=68 // pred_region
          %319 = vst [vmem:[#allocation2] sm:$0xff] 0.0
          %320 = vst [vmem:[#allocation2 + $0x8] sm:$0xff] 0.0
          %321 = vst [vmem:[#allocation2 + $0x10] sm:$0xff] 0.0
          %322 = vst [vmem:[#allocation2 + $0x18] sm:$0xff] 0.0
          %323 = vst [vmem:[#allocation2 + $0x20] sm:$0xff] 0.0
          %324 = vst [vmem:[#allocation2 + $0x28] sm:$0xff] 0.0
          %325 = vst [vmem:[#allocation2 + $0x30] sm:$0xff] 0.0
          %326 = vst [vmem:[#allocation2 + $0x38] sm:$0xff] 0.0
          %327 = vst [vmem:[#allocation2 + $0x40] sm:$0xff] 0.0
          %328 = vst [vmem:[#allocation2 + $0x48] sm:$0xff] 0.0
          %329 = vst [vmem:[#allocation2 + $0x50] sm:$0xff] 0.0
          %330 = vst [vmem:[#allocation2 + $0x58] sm:$0xff] 0.0
          %331 = vst [vmem:[#allocation2 + $0x60] sm:$0xff] 0.0
          %332 = vst [vmem:[#allocation2 + $0x68] sm:$0xff] 0.0
          %333 = vst [vmem:[#allocation2 + $0x70] sm:$0xff] 0.0
          %334 = vst [vmem:[#allocation2 + $0x78] sm:$0xff] 0.0
        $region77: #{gcn_forward.5} parent=68 // pred_fallthru
          _
        %v335 = vld [vmem:[#allocation2] sm:$0xff]
        %v336 = vld [vmem:[#allocation2 + $0x8] sm:$0xff]
        %v337 = vld [vmem:[#allocation2 + $0x10] sm:$0xff]
        %v338 = vld [vmem:[#allocation2 + $0x18] sm:$0xff]
        %v339 = vld [vmem:[#allocation2 + $0x20] sm:$0xff]
        %v340 = vld [vmem:[#allocation2 + $0x28] sm:$0xff]
        %v341 = vld [vmem:[#allocation2 + $0x30] sm:$0xff]
        %v342 = vld [vmem:[#allocation2 + $0x38] sm:$0xff]
        %v343 = vld [vmem:[#allocation2 + $0x40] sm:$0xff]
        %v344 = vld [vmem:[#allocation2 + $0x48] sm:$0xff]
        %v345 = vld [vmem:[#allocation2 + $0x50] sm:$0xff]
        %v346 = vld [vmem:[#allocation2 + $0x58] sm:$0xff]
        %v347 = vld [vmem:[#allocation2 + $0x60] sm:$0xff]
        %v348 = vld [vmem:[#allocation2 + $0x68] sm:$0xff]
        %v349 = vld [vmem:[#allocation2 + $0x70] sm:$0xff]
        %v350 = vld [vmem:[#allocation2 + $0x78] sm:$0xff]
        %v351 = vld [vmem:[%s276] sm:$0xf]
        %v352 = vld [vmem:[%s276 + $0x4] sm:$0xf]
        %v353 = vld [vmem:[%s276 + $0x8] sm:$0xf]
        %v354 = vld [vmem:[%s276 + $0xc] sm:$0xf]
        %v355 = vld [vmem:[%s276 + $0x10] sm:$0xf]
        %v356 = vld [vmem:[%s276 + $0x14] sm:$0xf]
        %v357 = vld [vmem:[%s276 + $0x18] sm:$0xf]
        %v358 = vld [vmem:[%s276 + $0x1c] sm:$0xf]
        %v359 = vld [vmem:[%s276 + $0x20] sm:$0xf]
        %v360 = vld [vmem:[%s276 + $0x24] sm:$0xf]
        %v361 = vld [vmem:[%s276 + $0x28] sm:$0xf]
        %v362 = vld [vmem:[%s276 + $0x2c] sm:$0xf]
        %v363 = vld [vmem:[%s276 + $0x30] sm:$0xf]
        %v364 = vld [vmem:[%s276 + $0x34] sm:$0xf]
        %v365 = vld [vmem:[%s276 + $0x38] sm:$0xf]
        %v366 = vld [vmem:[%s276 + $0x3c] sm:$0xf]
        %v367 = vld [vmem:[%s307] sm:$0xf]
        %v368 = vld [vmem:[%s307 + $0x4] sm:$0xf]
        %v369 = vld [vmem:[%s307 + $0x8] sm:$0xf]
        %v370 = vld [vmem:[%s307 + $0xc] sm:$0xf]
        %v371 = vld [vmem:[%s307 + $0x10] sm:$0xf]
        %v372 = vld [vmem:[%s307 + $0x14] sm:$0xf]
        %v373 = vld [vmem:[%s307 + $0x18] sm:$0xf]
        %v374 = vld [vmem:[%s307 + $0x1c] sm:$0xf]
        %v375 = vld [vmem:[%s307 + $0x20] sm:$0xf]
        %v376 = vld [vmem:[%s307 + $0x24] sm:$0xf]
        %v377 = vld [vmem:[%s307 + $0x28] sm:$0xf]
        %v378 = vld [vmem:[%s307 + $0x2c] sm:$0xf]
        %v379 = vld [vmem:[%s307 + $0x30] sm:$0xf]
        %v380 = vld [vmem:[%s307 + $0x34] sm:$0xf]
        %v381 = vld [vmem:[%s307 + $0x38] sm:$0xf]
        %v382 = vld [vmem:[%s307 + $0x3c] sm:$0xf]
        %v399 = vunpack.c.l.b16 %v351
        %v400 = vunpack.c.l.b16 %v352
        %v401 = vunpack.c.l.b16 %v353
        %v402 = vunpack.c.l.b16 %v354
        %v403 = vunpack.c.l.b16 %v355
        %v404 = vunpack.c.l.b16 %v356
        %v405 = vunpack.c.l.b16 %v357
        %v406 = vunpack.c.l.b16 %v358
        %v407 = vunpack.c.l.b16 %v359
        %v408 = vunpack.c.l.b16 %v360
        %v409 = vunpack.c.l.b16 %v361
        %v410 = vunpack.c.l.b16 %v362
        %v411 = vunpack.c.l.b16 %v363
        %v412 = vunpack.c.l.b16 %v364
        %v413 = vunpack.c.l.b16 %v365
        %v414 = vunpack.c.l.b16 %v366
        %v415 = vpack.c.b16 %v400, %v399
        %v416 = vpack.c.b16 %v402, %v401
        %v417 = vpack.c.b16 %v404, %v403
        %v418 = vpack.c.b16 %v406, %v405
        %v419 = vpack.c.b16 %v408, %v407
        %v420 = vpack.c.b16 %v410, %v409
        %v421 = vpack.c.b16 %v412, %v411
        %v422 = vpack.c.b16 %v414, %v413
        %v447 = vunpack.c.l.b16 %v367
        %v448 = vunpack.c.l.b16 %v368
        %v449 = vunpack.c.l.b16 %v369
        %v450 = vunpack.c.l.b16 %v370
        %v451 = vunpack.c.l.b16 %v371
        %v452 = vunpack.c.l.b16 %v372
        %v453 = vunpack.c.l.b16 %v373
        %v454 = vunpack.c.l.b16 %v374
        %v455 = vunpack.c.l.b16 %v375
        %v456 = vunpack.c.l.b16 %v376
        %v457 = vunpack.c.l.b16 %v377
        %v458 = vunpack.c.l.b16 %v378
        %v459 = vunpack.c.l.b16 %v379
        %v460 = vunpack.c.l.b16 %v380
        %v461 = vunpack.c.l.b16 %v381
        %v462 = vunpack.c.l.b16 %v382
        %v463 = vpack.c.b16 %v448, %v447
        %v464 = vpack.c.b16 %v450, %v449
        %v465 = vpack.c.b16 %v452, %v451
        %v466 = vpack.c.b16 %v454, %v453
        %v467 = vpack.c.b16 %v456, %v455
        %v468 = vpack.c.b16 %v458, %v457
        %v469 = vpack.c.b16 %v460, %v459
        %v470 = vpack.c.b16 %v462, %v461
        %479 = vmatpush.bf16.msra.mxu0 %v470
        %480 = vmatpush.bf16.msra.mxu0 %v469
        %481 = vmatpush.bf16.msra.mxu0 %v468
        %482 = vmatpush.bf16.msra.mxu0 %v467
        %483 = vmatpush.bf16.msra.mxu0 %v466
        %484 = vmatpush.bf16.msra.mxu0 %v465
        %485 = vmatpush.bf16.msra.mxu0 %v464
        %486 = vmatpush.bf16.msra.mxu0 %v463
        %487 = vmatmul.bf16.gmra.mxu0 %v415
        %v488 = vpop.f32.mrf.mxu0
        %v489 = vadd.f32 0.0, %v488
        %v490 = vpop.f32.mrf.mxu0
        %v491 = vadd.f32 0.0, %v490
        %492 = vmatmul.bf16.gmra.mxu0 %v416
        %v493 = vpop.f32.mrf.mxu0
        %v494 = vadd.f32 0.0, %v493
        %v495 = vpop.f32.mrf.mxu0
        %v496 = vadd.f32 0.0, %v495
        %497 = vmatmul.bf16.gmra.mxu0 %v417
        %v498 = vpop.f32.mrf.mxu0
        %v499 = vadd.f32 0.0, %v498
        %v500 = vpop.f32.mrf.mxu0
        %v501 = vadd.f32 0.0, %v500
        %502 = vmatmul.bf16.gmra.mxu0 %v418
        %v503 = vpop.f32.mrf.mxu0
        %v504 = vadd.f32 0.0, %v503
        %v505 = vpop.f32.mrf.mxu0
        %v506 = vadd.f32 0.0, %v505
        %507 = vmatmul.bf16.gmra.mxu0 %v419
        %v508 = vpop.f32.mrf.mxu0
        %v509 = vadd.f32 0.0, %v508
        %v510 = vpop.f32.mrf.mxu0
        %v511 = vadd.f32 0.0, %v510
        %512 = vmatmul.bf16.gmra.mxu0 %v420
        %v513 = vpop.f32.mrf.mxu0
        %v514 = vadd.f32 0.0, %v513
        %v515 = vpop.f32.mrf.mxu0
        %v516 = vadd.f32 0.0, %v515
        %517 = vmatmul.bf16.gmra.mxu0 %v421
        %v518 = vpop.f32.mrf.mxu0
        %v519 = vadd.f32 0.0, %v518
        %v520 = vpop.f32.mrf.mxu0
        %v521 = vadd.f32 0.0, %v520
        %522 = vmatmul.bf16.gmra.mxu0 %v422
        %v523 = vpop.f32.mrf.mxu0
        %v524 = vadd.f32 0.0, %v523
        %v525 = vpop.f32.mrf.mxu0
        %v526 = vadd.f32 0.0, %v525
        %527 = vdwg.mxu0
        %v528 = vadd.f32 %v335, %v489
        %v529 = vadd.f32 %v336, %v491
        %v530 = vadd.f32 %v337, %v494
        %v531 = vadd.f32 %v338, %v496
        %v532 = vadd.f32 %v339, %v499
        %v533 = vadd.f32 %v340, %v501
        %v534 = vadd.f32 %v341, %v504
        %v535 = vadd.f32 %v342, %v506
        %v536 = vadd.f32 %v343, %v509
        %v537 = vadd.f32 %v344, %v511
        %v538 = vadd.f32 %v345, %v514
        %v539 = vadd.f32 %v346, %v516
        %v540 = vadd.f32 %v347, %v519
        %v541 = vadd.f32 %v348, %v521
        %v542 = vadd.f32 %v349, %v524
        %v543 = vadd.f32 %v350, %v526
        %544 = vst [vmem:[#allocation2] sm:$0xff] %v528
        %545 = vst [vmem:[#allocation2 + $0x8] sm:$0xff] %v529
        %546 = vst [vmem:[#allocation2 + $0x10] sm:$0xff] %v530
        %547 = vst [vmem:[#allocation2 + $0x18] sm:$0xff] %v531
        %548 = vst [vmem:[#allocation2 + $0x20] sm:$0xff] %v532
        %549 = vst [vmem:[#allocation2 + $0x28] sm:$0xff] %v533
        %550 = vst [vmem:[#allocation2 + $0x30] sm:$0xff] %v534
        %551 = vst [vmem:[#allocation2 + $0x38] sm:$0xff] %v535
        %552 = vst [vmem:[#allocation2 + $0x40] sm:$0xff] %v536
        %553 = vst [vmem:[#allocation2 + $0x48] sm:$0xff] %v537
        %554 = vst [vmem:[#allocation2 + $0x50] sm:$0xff] %v538
        %555 = vst [vmem:[#allocation2 + $0x58] sm:$0xff] %v539
        %556 = vst [vmem:[#allocation2 + $0x60] sm:$0xff] %v540
        %557 = vst [vmem:[#allocation2 + $0x68] sm:$0xff] %v541
        %558 = vst [vmem:[#allocation2 + $0x70] sm:$0xff] %v542
        %559 = vst [vmem:[#allocation2 + $0x78] sm:$0xff] %v543
        %p560 = scmp.eq.s32.totalorder %s19, 2
        // Predicated region
        $region78: #{gcn_forward.5} parent=68 // pred_check
          %p561 = pneg %p560
        $region79: #{gcn_forward.5} parent=68 // pred_check_branch
          %563 = sbr.rel (%p561) target = $region81
        $region80: #{gcn_forward.5} parent=68 // pred_region
          %v564 = vld [vmem:[#allocation2] sm:$0xff]
          %v565 = vld [vmem:[#allocation2 + $0x8] sm:$0xff]
          %v566 = vld [vmem:[#allocation2 + $0x10] sm:$0xff]
          %v567 = vld [vmem:[#allocation2 + $0x18] sm:$0xff]
          %v568 = vld [vmem:[#allocation2 + $0x20] sm:$0xff]
          %v569 = vld [vmem:[#allocation2 + $0x28] sm:$0xff]
          %v570 = vld [vmem:[#allocation2 + $0x30] sm:$0xff]
          %v571 = vld [vmem:[#allocation2 + $0x38] sm:$0xff]
          %v572 = vld [vmem:[#allocation2 + $0x40] sm:$0xff]
          %v573 = vld [vmem:[#allocation2 + $0x48] sm:$0xff]
          %v574 = vld [vmem:[#allocation2 + $0x50] sm:$0xff]
          %v575 = vld [vmem:[#allocation2 + $0x58] sm:$0xff]
          %v576 = vld [vmem:[#allocation2 + $0x60] sm:$0xff]
          %v577 = vld [vmem:[#allocation2 + $0x68] sm:$0xff]
          %v578 = vld [vmem:[#allocation2 + $0x70] sm:$0xff]
          %v579 = vld [vmem:[#allocation2 + $0x78] sm:$0xff]
          %v580 = vld [vmem:[%s2] sm:$0x1]
          %v582 = vperm.slane %v580, 0
          %v584 = vadd.f32 %v564, %v582
          %v585 = vadd.f32 %v565, %v582
          %v586 = vadd.f32 %v566, %v582
          %v587 = vadd.f32 %v567, %v582
          %v588 = vadd.f32 %v568, %v582
          %v589 = vadd.f32 %v569, %v582
          %v590 = vadd.f32 %v570, %v582
          %v591 = vadd.f32 %v571, %v582
          %v592 = vadd.f32 %v572, %v582
          %v593 = vadd.f32 %v573, %v582
          %v594 = vadd.f32 %v574, %v582
          %v595 = vadd.f32 %v575, %v582
          %v596 = vadd.f32 %v576, %v582
          %v597 = vadd.f32 %v577, %v582
          %v598 = vadd.f32 %v578, %v582
          %v599 = vadd.f32 %v579, %v582
          %v600 = vmax.f32 %v584, 0.0
          %v601 = vmax.f32 %v585, 0.0
          %v602 = vmax.f32 %v586, 0.0
          %v603 = vmax.f32 %v587, 0.0
          %v604 = vmax.f32 %v588, 0.0
          %v605 = vmax.f32 %v589, 0.0
          %v606 = vmax.f32 %v590, 0.0
          %v607 = vmax.f32 %v591, 0.0
          %v608 = vmax.f32 %v592, 0.0
          %v609 = vmax.f32 %v593, 0.0
          %v610 = vmax.f32 %v594, 0.0
          %v611 = vmax.f32 %v595, 0.0
          %v612 = vmax.f32 %v596, 0.0
          %v613 = vmax.f32 %v597, 0.0
          %v614 = vmax.f32 %v598, 0.0
          %v615 = vmax.f32 %v599, 0.0
          %v616 = vpack.c.bf16 %v600, %v600
          %v617 = vpack.c.bf16 %v601, %v601
          %v618 = vpack.c.bf16 %v602, %v602
          %v619 = vpack.c.bf16 %v603, %v603
          %v620 = vpack.c.bf16 %v604, %v604
          %v621 = vpack.c.bf16 %v605, %v605
          %v622 = vpack.c.bf16 %v606, %v606
          %v623 = vpack.c.bf16 %v607, %v607
          %v624 = vpack.c.bf16 %v608, %v608
          %v625 = vpack.c.bf16 %v609, %v609
          %v626 = vpack.c.bf16 %v610, %v610
          %v627 = vpack.c.bf16 %v611, %v611
          %v628 = vpack.c.bf16 %v612, %v612
          %v629 = vpack.c.bf16 %v613, %v613
          %v630 = vpack.c.bf16 %v614, %v614
          %v631 = vpack.c.bf16 %v615, %v615
          %632 = vst [vmem:[%s313] sm:$0xf] %v616
          %633 = vst [vmem:[%s313 + $0x4] sm:$0xf] %v617
          %634 = vst [vmem:[%s313 + $0x8] sm:$0xf] %v618
          %635 = vst [vmem:[%s313 + $0xc] sm:$0xf] %v619
          %636 = vst [vmem:[%s313 + $0x10] sm:$0xf] %v620
          %637 = vst [vmem:[%s313 + $0x14] sm:$0xf] %v621
          %638 = vst [vmem:[%s313 + $0x18] sm:$0xf] %v622
          %639 = vst [vmem:[%s313 + $0x1c] sm:$0xf] %v623
          %640 = vst [vmem:[%s313 + $0x20] sm:$0xf] %v624
          %641 = vst [vmem:[%s313 + $0x24] sm:$0xf] %v625
          %642 = vst [vmem:[%s313 + $0x28] sm:$0xf] %v626
          %643 = vst [vmem:[%s313 + $0x2c] sm:$0xf] %v627
          %644 = vst [vmem:[%s313 + $0x30] sm:$0xf] %v628
          %645 = vst [vmem:[%s313 + $0x34] sm:$0xf] %v629
          %646 = vst [vmem:[%s313 + $0x38] sm:$0xf] %v630
          %647 = vst [vmem:[%s313 + $0x3c] sm:$0xf] %v631
        $region81: #{gcn_forward.5} parent=68 // pred_fallthru
          _
        %s648 = smul.u32 16, %s18
        %p649 = scmp.lt.s32.totalorder %s648, 47
        %s650 = scalar_select %p649, %s648, 47
        %s651 = smul.addr %s650, 4
        %s652 = scalar_lea.vmem %s3, %s651
        // Predicated region
        $region82: #{gcn_forward.5} parent=68 // pred_check
          %p653 = pneg %p119
        $region83: #{gcn_forward.5} parent=68 // pred_check_branch
          %655 = sbr.rel (%p653) target = $region85
        $region84: #{gcn_forward.5} parent=68 // pred_region
          %s656 = smul.u32 16, %s18
        $region85: #{gcn_forward.5} parent=68 // pred_fallthru
          _
      $region69: #{gcn_forward.5} parent=5 // pred_fallthru
        _
      %p657 = scmp.le.s32.totalorder 2, %s9
      // Predicated region
      $region86: #{gcn_forward.5} parent=5 // pred_check
        %p658 = pneg %p657
      $region87: #{gcn_forward.5} parent=5 // pred_check_branch
        %660 = sbr.rel (%p658) target = $region89
      $region88: #{gcn_forward.5} parent=5 // pred_region
        %s661 = ssub.s32 %s9, 2
        // Predicated region
        $region90: #{gcn_forward.5} parent=88 // pred_check
          %p662 = pneg %p125
        $region91: #{gcn_forward.5} parent=88 // pred_check_branch
          %664 = sbr.rel (%p662) target = $region93
        $region92: #{gcn_forward.5} parent=88 // pred_region
          %s665 = smul.u32 16, %s20
          %p666 = scmp.lt.s32.totalorder %s665, 47
          %s667 = scalar_select %p666, %s665, 47
          %s668 = smul.addr %s667, 4
          %s669 = scalar_lea.vmem %s3, %s668
        $region93: #{gcn_forward.5} parent=88 // pred_fallthru
          _
      $region89: #{gcn_forward.5} parent=5 // pred_fallthru
        _
    $region6: #{gcn_forward.5} parent=1 // loop_footer
      %s13 = sadd.s32 1, %s9
    $region7: #{gcn_forward.5} parent=1 // loop_footer_branch
      %8 = sbr.rel target = $region3
    $region8: #{gcn_forward.5} parent=1 // loop_exit
      _

// kernel: gcn_forward.7
$region0: #{gcn_forward.7}
  #allocation0 [shape = 'u32[]', space=smem, size = 0x4, offset = 0x4, fixed_abs, tag = 'smem constant byte address 0x4 - core index']
  #allocation1 [shape = 'u32[72,128]{1,0:T(1,128)}', space=vmem, size = 0x9000, scoped, tag = 'internal scratch']
  #allocation2 [shape = 'f32[128,128]{1,0:T(8,128)}', space=vmem, size = 0x10000, scoped, tag = 'scratch operand']
  %s0 = inlined_call_operand.vmem [shape: bf16[384,384], index: 0, kind: input, shape index: {}]
  %s1 = inlined_call_operand.vmem [shape: bf16[384,128], index: 1, kind: input, shape index: {}]
  %s2 = inlined_call_operand.vmem [shape: f32[1,128], index: 2, kind: input, shape index: {}]
  %s3 = inlined_call_operand.vmem [shape: f32[1,128], index: 3, kind: output, shape index: {}]
  %s4 = sld [smem:[#allocation0]]
  $region102: #{gcn_forward.7} parent=0
    _
  %s6 = ssub.s32 1, %s4
  %s7 = scalar_select 0, %s6, %s4
  $region1: #{gcn_forward.7} parent=0
    #allocation3 [shape = 'u8[65536]{0}', space=vmem, size = 0x10000, scoped, tag = 'input window, operand 0']
    loop: start=0, step=1, limit=11
    $region2: #{gcn_forward.7} parent=1 // loop_pre_header
      _
    $region3: #{gcn_forward.7} parent=1 // loop_header
      %s9 = sphi 0, %s13
      %p10 = scmp.ge.s32.totalorder %s9, 11
      %s16 = sphi 0, %s28
      %s17 = sphi 0, %s24
      %s18 = sphi 0, %s16
      %s19 = sphi 0, %s17
      %s20 = sphi 0, %s18
      %s21 = sphi 0, %s19
      %s33 = sphi 0, %s35
      %s36 = sphi 0, %s33
      %s37 = sphi 0, %s36
      %s53 = sphi 0, %s37
      %s59 = sphi 0, %s61
      %s62 = sphi 0, %s59
      %s63 = sphi 0, %s62
      %s79 = sphi 0, %s63
      %s83 = sphi 0, %s83
      %s85 = sphi 0, %s83
      %s86 = sphi 0, %s85
      %s100 = sphi 0, %s86
      %s104 = sphi 0, %s104
      %s106 = sphi 0, %s104
      %s107 = sphi 0, %s106
      %s121 = sphi 0, %s107
    $region4: #{gcn_forward.7} parent=1 // loop_header_branch
      %12 = sbr.rel (%p10) target = $region8
    $region5: #{gcn_forward.7} parent=1 // loop_body
      %s14 = ssub.s32 %s9, 1
      %s15 = ssub.s32 %s9, 2
      %s22 = sadd.s32 1, %s17
      %p23 = scmp.ge.s32.totalorder %s22, 3
      %s24 = scalar_select %p23, 0, %s22
      %s25 = sadd.s32 1, %s16
      %s26 = scalar_select %p23, %s25, %s16
      %p27 = scmp.ge.s32.totalorder %s26, 3
      %s28 = scalar_select %p27, 0, %s26
      %s29 = ssub.s32 %s16, %s28
      %s30 = ssub.s32 %s17, %s24
      %s31 = sor.u32 %s29, %s30
      %p32 = scmp.eq.s32.totalorder %s31, 0
      %s34 = sadd.s32 %s33, 1
      %s35 = scalar_select %p32, %s33, %s34
      %p38 = pneg %p32
      %p39 = scmp.eq.s32.totalorder %s9, 8
      %p40 = por %p38, %p39
      %p41 = scmp.ne.s32.totalorder %s33, %s36
      %p42 = scmp.eq.s32.totalorder %s9, 0
      %p43 = por %p41, %p42
      %p44 = scmp.ne.s32.totalorder %s33, %s36
      %p45 = scmp.eq.s32.totalorder %s14, 8
      %p46 = por %p44, %p45
      %p47 = scmp.ne.s32.totalorder %s36, %s37
      %p48 = scmp.eq.s32.totalorder %s14, 0
      %p49 = por %p47, %p48
      %p50 = scmp.ne.s32.totalorder %s36, %s37
      %p51 = scmp.eq.s32.totalorder %s15, 8
      %p52 = por %p50, %p51
      %p54 = scmp.ne.s32.totalorder %s37, %s53
      %p55 = scmp.eq.s32.totalorder %s15, 0
      %p56 = por %p54, %p55
      %s57 = ssub.s32 %s17, %s24
      %p58 = scmp.eq.s32.totalorder %s57, 0
      %s60 = sadd.s32 %s59, 1
      %s61 = scalar_select %p58, %s59, %s60
      %p64 = pneg %p58
      %p65 = scmp.eq.s32.totalorder %s9, 8
      %p66 = por %p64, %p65
      %p67 = scmp.ne.s32.totalorder %s59, %s62
      %p68 = scmp.eq.s32.totalorder %s9, 0
      %p69 = por %p67, %p68
      %p70 = scmp.ne.s32.totalorder %s59, %s62
      %p71 = scmp.eq.s32.totalorder %s14, 8
      %p72 = por %p70, %p71
      %p73 = scmp.ne.s32.totalorder %s62, %s63
      %p74 = scmp.eq.s32.totalorder %s14, 0
      %p75 = por %p73, %p74
      %p76 = scmp.ne.s32.totalorder %s62, %s63
      %p77 = scmp.eq.s32.totalorder %s15, 8
      %p78 = por %p76, %p77
      %p80 = scmp.ne.s32.totalorder %s63, %s79
      %p81 = scmp.eq.s32.totalorder %s15, 0
      %p82 = por %p80, %p81
      %s84 = sadd.s32 %s83, 1
      %p87 = scmp.eq.s32.totalorder %s9, 8
      %p88 = scmp.ne.s32.totalorder %s83, %s85
      %p89 = scmp.eq.s32.totalorder %s9, 0
      %p90 = por %p88, %p89
      %p91 = scmp.ne.s32.totalorder %s83, %s85
      %p92 = scmp.eq.s32.totalorder %s14, 8
      %p93 = por %p91, %p92
      %p94 = scmp.ne.s32.totalorder %s85, %s86
      %p95 = scmp.eq.s32.totalorder %s14, 0
      %p96 = por %p94, %p95
      %p97 = scmp.ne.s32.totalorder %s85, %s86
      %p98 = scmp.eq.s32.totalorder %s15, 8
      %p99 = por %p97, %p98
      %p101 = scmp.ne.s32.totalorder %s86, %s100
      %p102 = scmp.eq.s32.totalorder %s15, 0
      %p103 = por %p101, %p102
      %s105 = sadd.s32 %s104, 1
      %p108 = scmp.eq.s32.totalorder %s9, 8
      %p109 = scmp.ne.s32.totalorder %s104, %s106
      %p110 = scmp.eq.s32.totalorder %s9, 0
      %p111 = por %p109, %p110
      %p112 = scmp.ne.s32.totalorder %s104, %s106
      %p113 = scmp.eq.s32.totalorder %s14, 8
      %p114 = por %p112, %p113
      %p115 = scmp.ne.s32.totalorder %s106, %s107
      %p116 = scmp.eq.s32.totalorder %s14, 0
      %p117 = por %p115, %p116
      %p118 = scmp.ne.s32.totalorder %s106, %s107
      %p119 = scmp.eq.s32.totalorder %s15, 8
      %p120 = por %p118, %p119
      %p122 = scmp.ne.s32.totalorder %s107, %s121
      %p123 = scmp.eq.s32.totalorder %s15, 0
      %p124 = por %p122, %p123
      %p125 = scmp.le.s32.totalorder 1, %s9
      %p126 = scmp.lt.s32.totalorder %s9, 10
      %p127 = pnand %p125, %p126
      %p128 = pneg %p127
      // Predicated region
      $region9: #{gcn_forward.7} parent=5 // pred_check
        _
      $region10: #{gcn_forward.7} parent=5 // pred_check_branch
        %130 = sbr.rel (%p127) target = $region12
      $region11: #{gcn_forward.7} parent=5 // pred_region
        %s131 = ssub.s32 %s9, 1
        // Predicated region
        $region13: #{gcn_forward.7} parent=11 // pred_check
          %p132 = pneg %p96
        $region14: #{gcn_forward.7} parent=11 // pred_check_branch
          %134 = sbr.rel (%p132) target = $region16
        $region15: #{gcn_forward.7} parent=11 // pred_region
          _
        $region16: #{gcn_forward.7} parent=11 // pred_fallthru
          _
      $region12: #{gcn_forward.7} parent=5 // pred_fallthru
        _
      %p135 = scmp.lt.s32.totalorder %s9, 9
      // Predicated region
      $region17: #{gcn_forward.7} parent=5 // pred_check
        %p136 = pneg %p135
      $region18: #{gcn_forward.7} parent=5 // pred_check_branch
        %138 = sbr.rel (%p136) target = $region20
      $region19: #{gcn_forward.7} parent=5 // pred_region
        // Predicated region
        $region21: #{gcn_forward.7} parent=19 // pred_check
          %p139 = pneg %p43
        $region22: #{gcn_forward.7} parent=19 // pred_check_branch
          %141 = sbr.rel (%p139) target = $region24
        $region23: #{gcn_forward.7} parent=19 // pred_region
          %s142 = sand.u32 %s33, 1
          %s143 = sand.u32 %s33, 1
          %s144 = smul.addr %s143, 64
          %s145 = scalar_lea.vmem [#allocation3], %s144
          %s146 = smul.u32 16, %s16
          %s147 = smul.addr %s146, 3
          %s148 = sadd.s32 %s17, %s147
          %s149 = smul.addr %s148, 4
          %s150 = scalar_lea.vmem %s0, %s149
          // Predicated region
          $region25: #{gcn_forward.7} parent=23 // pred_check
            _
          $region26: #{gcn_forward.7} parent=23 // pred_check_branch
            %152 = sbr.rel (0) target = $region28
          $region27: #{gcn_forward.7} parent=23 // pred_region
            // Predicated region
            $region29: #{gcn_forward.7} parent=27 // pred_check
              _
            $region30: #{gcn_forward.7} parent=27 // pred_check_branch
              %154 = sbr.rel target = $region32
            $region31: #{gcn_forward.7} parent=27 // pred_region
              // Predicated region
              $region44: #{gcn_forward.7} parent=31 // pred_check
                _
              $region45: #{gcn_forward.7} parent=31 // pred_check_branch
                %200 = sbr.rel (0) target = $region47
              $region46: #{gcn_forward.7} parent=31 // pred_region
                loop: start=0, step=1, limit=1
                $region48: #{gcn_forward.7} parent=46 // loop_pre_header
                  _
                $region49: #{gcn_forward.7} parent=46 // loop_header
                  %s202 = sphi 0, %s206
                  %p203 = scmp.ge.s32.totalorder %s202, 1
                  %s207 = sphi %s150, %s150
                  %s208 = sphi %s145, %s145
                $region50: #{gcn_forward.7} parent=46 // loop_header_branch
                  %205 = sbr.rel (%p203) target = $region54
                $region51: #{gcn_forward.7} parent=46 // loop_body
                  _
                $region52: #{gcn_forward.7} parent=46 // loop_footer
                  %s206 = sadd.s32 1, %s202
                $region53: #{gcn_forward.7} parent=46 // loop_footer_branch
                  %201 = sbr.rel target = $region49
                $region54: #{gcn_forward.7} parent=46 // loop_exit
                  _
                %s210 = ssub.s32 16, 1
                loop: start=0, step=1, limit=1
                $region55: #{gcn_forward.7} parent=46 // loop_pre_header
                  _
                $region56: #{gcn_forward.7} parent=46 // loop_header
                  %s212 = sphi 0, %s216
                  %p213 = scmp.ge.s32.totalorder %s212, 1
                  %s217 = sphi %s150, %s150
                  %s218 = sphi %s145, %s145
                $region57: #{gcn_forward.7} parent=46 // loop_header_branch
                  %215 = sbr.rel (%p213) target = $region61
                $region58: #{gcn_forward.7} parent=46 // loop_body
                  %v219 = vld [vmem:[%s217] sm:%s210]
                  %220 = vst [vmem:[%s218] sm:%s210] %v219
                  %v221 = vld [vmem:[%s217 + $0xc] sm:%s210]
                  %222 = vst [vmem:[%s218 + $0x4] sm:%s210] %v221
                  %v223 = vld [vmem:[%s217 + $0x18] sm:%s210]
                  %224 = vst [vmem:[%s218 + $0x8] sm:%s210] %v223
                  %v225 = vld [vmem:[%s217 + $0x24] sm:%s210]
                  %226 = vst [vmem:[%s218 + $0xc] sm:%s210] %v225
                  %v227 = vld [vmem:[%s217 + $0x30] sm:%s210]
                  %228 = vst [vmem:[%s218 + $0x10] sm:%s210] %v227
                  %v229 = vld [vmem:[%s217 + $0x3c] sm:%s210]
                  %230 = vst [vmem:[%s218 + $0x14] sm:%s210] %v229
                  %v231 = vld [vmem:[%s217 + $0x48] sm:%s210]
                  %232 = vst [vmem:[%s218 + $0x18] sm:%s210] %v231
                  %v233 = vld [vmem:[%s217 + $0x54] sm:%s210]
                  %234 = vst [vmem:[%s218 + $0x1c] sm:%s210] %v233
                  %v235 = vld [vmem:[%s217 + $0x60] sm:%s210]
                  %236 = vst [vmem:[%s218 + $0x20] sm:%s210] %v235
                  %v237 = vld [vmem:[%s217 + $0x6c] sm:%s210]
                  %238 = vst [vmem:[%s218 + $0x24] sm:%s210] %v237
                  %v239 = vld [vmem:[%s217 + $0x78] sm:%s210]
                  %240 = vst [vmem:[%s218 + $0x28] sm:%s210] %v239
                  %v241 = vld [vmem:[%s217 + $0x84] sm:%s210]
                  %242 = vst [vmem:[%s218 + $0x2c] sm:%s210] %v241
                  %v243 = vld [vmem:[%s217 + $0x90] sm:%s210]
                  %244 = vst [vmem:[%s218 + $0x30] sm:%s210] %v243
                  %v245 = vld [vmem:[%s217 + $0x9c] sm:%s210]
                  %246 = vst [vmem:[%s218 + $0x34] sm:%s210] %v245
                  %v247 = vld [vmem:[%s217 + $0xa8] sm:%s210]
                  %248 = vst [vmem:[%s218 + $0x38] sm:%s210] %v247
                  %v249 = vld [vmem:[%s217 + $0xb4] sm:%s210]
                  %250 = vst [vmem:[%s218 + $0x3c] sm:%s210] %v249
                $region59: #{gcn_forward.7} parent=46 // loop_footer
                  %s216 = sadd.s32 1, %s212
                $region60: #{gcn_forward.7} parent=46 // loop_footer_branch
                  %211 = sbr.rel target = $region56
                $region61: #{gcn_forward.7} parent=46 // loop_exit
                  _
              $region47: #{gcn_forward.7} parent=31 // pred_fallthru
                _
            $region32: #{gcn_forward.7} parent=27 // pred_fallthru
              _
            // Predicated region
            $region33: #{gcn_forward.7} parent=27 // pred_check
              _
            $region34: #{gcn_forward.7} parent=27 // pred_check_branch
              %156 = sbr.rel (0) target = $region36
            $region35: #{gcn_forward.7} parent=27 // pred_region
              %s158 = ssub.s32 16, 1
              loop: start=0, step=1, limit=1
              $region37: #{gcn_forward.7} parent=35 // loop_pre_header
                _
              $region38: #{gcn_forward.7} parent=35 // loop_header
                %s160 = sphi 0, %s164
                %p161 = scmp.ge.s32.totalorder %s160, 1
                %s165 = sphi %s150, %s150
                %s166 = sphi %s145, %s145
              $region39: #{gcn_forward.7} parent=35 // loop_header_branch
                %163 = sbr.rel (%p161) target = $region43
              $region40: #{gcn_forward.7} parent=35 // loop_body
                %v167 = vld [vmem:[%s165] sm:%s158]
                %168 = vst [vmem:[%s166] sm:%s158] %v167
                %v169 = vld [vmem:[%s165 + $0xc] sm:%s158]
                %170 = vst [vmem:[%s166 + $0x4] sm:%s158] %v169
                %v171 = vld [vmem:[%s165 + $0x18] sm:%s158]
                %172 = vst [vmem:[%s166 + $0x8] sm:%s158] %v171
                %v173 = vld [vmem:[%s165 + $0x24] sm:%s158]
                %174 = vst [vmem:[%s166 + $0xc] sm:%s158] %v173
                %v175 = vld [vmem:[%s165 + $0x30] sm:%s158]
                %176 = vst [vmem:[%s166 + $0x10] sm:%s158] %v175
                %v177 = vld [vmem:[%s165 + $0x3c] sm:%s158]
                %178 = vst [vmem:[%s166 + $0x14] sm:%s158] %v177
                %v179 = vld [vmem:[%s165 + $0x48] sm:%s158]
                %180 = vst [vmem:[%s166 + $0x18] sm:%s158] %v179
                %v181 = vld [vmem:[%s165 + $0x54] sm:%s158]
                %182 = vst [vmem:[%s166 + $0x1c] sm:%s158] %v181
                %v183 = vld [vmem:[%s165 + $0x60] sm:%s158]
                %184 = vst [vmem:[%s166 + $0x20] sm:%s158] %v183
                %v185 = vld [vmem:[%s165 + $0x6c] sm:%s158]
                %186 = vst [vmem:[%s166 + $0x24] sm:%s158] %v185
                %v187 = vld [vmem:[%s165 + $0x78] sm:%s158]
                %188 = vst [vmem:[%s166 + $0x28] sm:%s158] %v187
                %v189 = vld [vmem:[%s165 + $0x84] sm:%s158]
                %190 = vst [vmem:[%s166 + $0x2c] sm:%s158] %v189
                %v191 = vld [vmem:[%s165 + $0x90] sm:%s158]
                %192 = vst [vmem:[%s166 + $0x30] sm:%s158] %v191
                %v193 = vld [vmem:[%s165 + $0x9c] sm:%s158]
                %194 = vst [vmem:[%s166 + $0x34] sm:%s158] %v193
                %v195 = vld [vmem:[%s165 + $0xa8] sm:%s158]
                %196 = vst [vmem:[%s166 + $0x38] sm:%s158] %v195
                %v197 = vld [vmem:[%s165 + $0xb4] sm:%s158]
                %198 = vst [vmem:[%s166 + $0x3c] sm:%s158] %v197
              $region41: #{gcn_forward.7} parent=35 // loop_footer
                %s164 = sadd.s32 1, %s160
              $region42: #{gcn_forward.7} parent=35 // loop_footer_branch
                %159 = sbr.rel target = $region38
              $region43: #{gcn_forward.7} parent=35 // loop_exit
                _
            $region36: #{gcn_forward.7} parent=27 // pred_fallthru
              _
          $region28: #{gcn_forward.7} parent=23 // pred_fallthru
            _
          %251 = vnop
        $region24: #{gcn_forward.7} parent=19 // pred_fallthru
          _
        // Predicated region
        $region62: #{gcn_forward.7} parent=19 // pred_check
          %p252 = pneg %p69
        $region63: #{gcn_forward.7} parent=19 // pred_check_branch
          %254 = sbr.rel (%p252) target = $region65
        $region64: #{gcn_forward.7} parent=19 // pred_region
          %s255 = smul.u32 16, %s17
          %p256 = scmp.lt.s32.totalorder %s255, 47
          %s257 = scalar_select %p256, %s255, 47
          %s258 = smul.addr %s257, 4
          %s259 = scalar_lea.vmem %s1, %s258
          %s260 = smul.u32 16, %s17
        $region65: #{gcn_forward.7} parent=19 // pred_fallthru
          _
      $region20: #{gcn_forward.7} parent=5 // pred_fallthru
        _
      %p261 = scmp.le.s32.totalorder 1, %s9
      %p262 = scmp.lt.s32.totalorder %s9, 10
      %p263 = pnand %p261, %p262
      %p264 = pneg %p263
      // Predicated region
      $region66: #{gcn_forward.7} parent=5 // pred_check
        _
      $region67: #{gcn_forward.7} parent=5 // pred_check_branch
        %266 = sbr.rel (%p263) target = $region69
      $region68: #{gcn_forward.7} parent=5 // pred_region
        %s267 = ssub.s32 %s9, 1
        %s268 = sand.u32 %s36, 1
        %s269 = sand.u32 %s36, 1
        %s270 = smul.addr %s269, 64
        %s271 = scalar_lea.vmem [#allocation3], %s270
        // Predicated region
        $region70: #{gcn_forward.7} parent=68 // pred_check
          %p272 = pneg %p49
        $region71: #{gcn_forward.7} parent=68 // pred_check_branch
          %274 = sbr.rel (%p272) target = $region73
        $region72: #{gcn_forward.7} parent=68 // pred_region
          _
        $region73: #{gcn_forward.7} parent=68 // pred_fallthru
          _
        %s275 = sand.u32 %s36, 1
        %s276 = sand.u32 %s36, 1
        %s277 = smul.addr %s276, 64
        %s278 = scalar_lea.vmem [#allocation3], %s277
        %p279 = pneg %p49
        %p280 = pneg %p46
        %s281 = smul.u32 16, %s19
        %p282 = scmp.lt.s32.totalorder %s281, 47
        %s283 = scalar_select %p282, %s281, 47
        %s284 = smul.addr %s283, 4
        %s285 = scalar_lea.vmem %s1, %s284
        %p286 = pneg %p75
        %p287 = pneg %p72
        %p288 = pneg %p96
        %p289 = pneg %p93
        %p290 = pneg %p117
        %p291 = pneg %p114
        %s292 = smul.u32 16, %s18
        %s293 = smul.u32 16, %s19
        %p294 = scmp.lt.s32.totalorder %s293, 47
        %s295 = scalar_select %p294, %s293, 47
        %s296 = smul.addr %s295, 4
        %s297 = scalar_lea.vmem %s1, %s296
        %s298 = smul.u32 16, %s19
        %p299 = scmp.eq.s32.totalorder %s18, 0
        %p300 = scmp.eq.s32.totalorder %s19, 0
        %p301 = pnand %p299, %p300
        %p302 = pneg %p301
        // Predicated region
        $region74: #{gcn_forward.7} parent=68 // pred_check
          _
        $region75: #{gcn_forward.7} parent=68 // pred_check_branch
          %304 = sbr.rel (%p301) target = $region77
        $region76: #{gcn_forward.7} parent=68 // pred_region
          %305 = vst [vmem:[%s3] sm:$0x1] 0.0
        $region77: #{gcn_forward.7} parent=68 // pred_fallthru
          _
        // Predicated region
        $region78: #{gcn_forward.7} parent=68 // pred_check
          %p306 = pneg %p300
        $region79: #{gcn_forward.7} parent=68 // pred_check_branch
          %308 = sbr.rel (%p306) target = $region81
        $region80: #{gcn_forward.7} parent=68 // pred_region
          %309 = vst [vmem:[#allocation2] sm:$0xff] 0.0
          %310 = vst [vmem:[#allocation2 + $0x8] sm:$0xff] 0.0
          %311 = vst [vmem:[#allocation2 + $0x10] sm:$0xff] 0.0
          %312 = vst [vmem:[#allocation2 + $0x18] sm:$0xff] 0.0
          %313 = vst [vmem:[#allocation2 + $0x20] sm:$0xff] 0.0
          %314 = vst [vmem:[#allocation2 + $0x28] sm:$0xff] 0.0
          %315 = vst [vmem:[#allocation2 + $0x30] sm:$0xff] 0.0
          %316 = vst [vmem:[#allocation2 + $0x38] sm:$0xff] 0.0
          %317 = vst [vmem:[#allocation2 + $0x40] sm:$0xff] 0.0
          %318 = vst [vmem:[#allocation2 + $0x48] sm:$0xff] 0.0
          %319 = vst [vmem:[#allocation2 + $0x50] sm:$0xff] 0.0
          %320 = vst [vmem:[#allocation2 + $0x58] sm:$0xff] 0.0
          %321 = vst [vmem:[#allocation2 + $0x60] sm:$0xff] 0.0
          %322 = vst [vmem:[#allocation2 + $0x68] sm:$0xff] 0.0
          %323 = vst [vmem:[#allocation2 + $0x70] sm:$0xff] 0.0
          %324 = vst [vmem:[#allocation2 + $0x78] sm:$0xff] 0.0
        $region81: #{gcn_forward.7} parent=68 // pred_fallthru
          _
        %v325 = vld [vmem:[#allocation2] sm:$0xff]
        %v326 = vld [vmem:[#allocation2 + $0x8] sm:$0xff]
        %v327 = vld [vmem:[#allocation2 + $0x10] sm:$0xff]
        %v328 = vld [vmem:[#allocation2 + $0x18] sm:$0xff]
        %v329 = vld [vmem:[#allocation2 + $0x20] sm:$0xff]
        %v330 = vld [vmem:[#allocation2 + $0x28] sm:$0xff]
        %v331 = vld [vmem:[#allocation2 + $0x30] sm:$0xff]
        %v332 = vld [vmem:[#allocation2 + $0x38] sm:$0xff]
        %v333 = vld [vmem:[#allocation2 + $0x40] sm:$0xff]
        %v334 = vld [vmem:[#allocation2 + $0x48] sm:$0xff]
        %v335 = vld [vmem:[#allocation2 + $0x50] sm:$0xff]
        %v336 = vld [vmem:[#allocation2 + $0x58] sm:$0xff]
        %v337 = vld [vmem:[#allocation2 + $0x60] sm:$0xff]
        %v338 = vld [vmem:[#allocation2 + $0x68] sm:$0xff]
        %v339 = vld [vmem:[#allocation2 + $0x70] sm:$0xff]
        %v340 = vld [vmem:[#allocation2 + $0x78] sm:$0xff]
        %v341 = vld [vmem:[%s271] sm:$0xf]
        %v342 = vld [vmem:[%s271 + $0x4] sm:$0xf]
        %v343 = vld [vmem:[%s271 + $0x8] sm:$0xf]
        %v344 = vld [vmem:[%s271 + $0xc] sm:$0xf]
        %v345 = vld [vmem:[%s271 + $0x10] sm:$0xf]
        %v346 = vld [vmem:[%s271 + $0x14] sm:$0xf]
        %v347 = vld [vmem:[%s271 + $0x18] sm:$0xf]
        %v348 = vld [vmem:[%s271 + $0x1c] sm:$0xf]
        %v349 = vld [vmem:[%s271 + $0x20] sm:$0xf]
        %v350 = vld [vmem:[%s271 + $0x24] sm:$0xf]
        %v351 = vld [vmem:[%s271 + $0x28] sm:$0xf]
        %v352 = vld [vmem:[%s271 + $0x2c] sm:$0xf]
        %v353 = vld [vmem:[%s271 + $0x30] sm:$0xf]
        %v354 = vld [vmem:[%s271 + $0x34] sm:$0xf]
        %v355 = vld [vmem:[%s271 + $0x38] sm:$0xf]
        %v356 = vld [vmem:[%s271 + $0x3c] sm:$0xf]
        %v357 = vld [vmem:[%s297] sm:$0xf]
        %v358 = vld [vmem:[%s297 + $0x4] sm:$0xf]
        %v359 = vld [vmem:[%s297 + $0x8] sm:$0xf]
        %v360 = vld [vmem:[%s297 + $0xc] sm:$0xf]
        %v361 = vld [vmem:[%s297 + $0x10] sm:$0xf]
        %v362 = vld [vmem:[%s297 + $0x14] sm:$0xf]
        %v363 = vld [vmem:[%s297 + $0x18] sm:$0xf]
        %v364 = vld [vmem:[%s297 + $0x1c] sm:$0xf]
        %v365 = vld [vmem:[%s297 + $0x20] sm:$0xf]
        %v366 = vld [vmem:[%s297 + $0x24] sm:$0xf]
        %v367 = vld [vmem:[%s297 + $0x28] sm:$0xf]
        %v368 = vld [vmem:[%s297 + $0x2c] sm:$0xf]
        %v369 = vld [vmem:[%s297 + $0x30] sm:$0xf]
        %v370 = vld [vmem:[%s297 + $0x34] sm:$0xf]
        %v371 = vld [vmem:[%s297 + $0x38] sm:$0xf]
        %v372 = vld [vmem:[%s297 + $0x3c] sm:$0xf]
        %v389 = vunpack.c.l.b16 %v341
        %v390 = vunpack.c.l.b16 %v342
        %v391 = vunpack.c.l.b16 %v343
        %v392 = vunpack.c.l.b16 %v344
        %v393 = vunpack.c.l.b16 %v345
        %v394 = vunpack.c.l.b16 %v346
        %v395 = vunpack.c.l.b16 %v347
        %v396 = vunpack.c.l.b16 %v348
        %v397 = vunpack.c.l.b16 %v349
        %v398 = vunpack.c.l.b16 %v350
        %v399 = vunpack.c.l.b16 %v351
        %v400 = vunpack.c.l.b16 %v352
        %v401 = vunpack.c.l.b16 %v353
        %v402 = vunpack.c.l.b16 %v354
        %v403 = vunpack.c.l.b16 %v355
        %v404 = vunpack.c.l.b16 %v356
        %v405 = vpack.c.b16 %v390, %v389
        %v406 = vpack.c.b16 %v392, %v391
        %v407 = vpack.c.b16 %v394, %v393
        %v408 = vpack.c.b16 %v396, %v395
        %v409 = vpack.c.b16 %v398, %v397
        %v410 = vpack.c.b16 %v400, %v399
        %v411 = vpack.c.b16 %v402, %v401
        %v412 = vpack.c.b16 %v404, %v403
        %v437 = vunpack.c.l.b16 %v357
        %v438 = vunpack.c.l.b16 %v358
        %v439 = vunpack.c.l.b16 %v359
        %v440 = vunpack.c.l.b16 %v360
        %v441 = vunpack.c.l.b16 %v361
        %v442 = vunpack.c.l.b16 %v362
        %v443 = vunpack.c.l.b16 %v363
        %v444 = vunpack.c.l.b16 %v364
        %v445 = vunpack.c.l.b16 %v365
        %v446 = vunpack.c.l.b16 %v366
        %v447 = vunpack.c.l.b16 %v367
        %v448 = vunpack.c.l.b16 %v368
        %v449 = vunpack.c.l.b16 %v369
        %v450 = vunpack.c.l.b16 %v370
        %v451 = vunpack.c.l.b16 %v371
        %v452 = vunpack.c.l.b16 %v372
        %v453 = vpack.c.b16 %v438, %v437
        %v454 = vpack.c.b16 %v440, %v439
        %v455 = vpack.c.b16 %v442, %v441
        %v456 = vpack.c.b16 %v444, %v443
        %v457 = vpack.c.b16 %v446, %v445
        %v458 = vpack.c.b16 %v448, %v447
        %v459 = vpack.c.b16 %v450, %v449
        %v460 = vpack.c.b16 %v452, %v451
        %469 = vmatpush.bf16.msra.mxu0 %v460
        %470 = vmatpush.bf16.msra.mxu0 %v459
        %471 = vmatpush.bf16.msra.mxu0 %v458
        %472 = vmatpush.bf16.msra.mxu0 %v457
        %473 = vmatpush.bf16.msra.mxu0 %v456
        %474 = vmatpush.bf16.msra.mxu0 %v455
        %475 = vmatpush.bf16.msra.mxu0 %v454
        %476 = vmatpush.bf16.msra.mxu0 %v453
        %477 = vmatmul.bf16.gmra.mxu0 %v405
        %v478 = vpop.f32.mrf.mxu0
        %v479 = vadd.f32 0.0, %v478
        %v480 = vpop.f32.mrf.mxu0
        %v481 = vadd.f32 0.0, %v480
        %482 = vmatmul.bf16.gmra.mxu0 %v406
        %v483 = vpop.f32.mrf.mxu0
        %v484 = vadd.f32 0.0, %v483
        %v485 = vpop.f32.mrf.mxu0
        %v486 = vadd.f32 0.0, %v485
        %487 = vmatmul.bf16.gmra.mxu0 %v407
        %v488 = vpop.f32.mrf.mxu0
        %v489 = vadd.f32 0.0, %v488
        %v490 = vpop.f32.mrf.mxu0
        %v491 = vadd.f32 0.0, %v490
        %492 = vmatmul.bf16.gmra.mxu0 %v408
        %v493 = vpop.f32.mrf.mxu0
        %v494 = vadd.f32 0.0, %v493
        %v495 = vpop.f32.mrf.mxu0
        %v496 = vadd.f32 0.0, %v495
        %497 = vmatmul.bf16.gmra.mxu0 %v409
        %v498 = vpop.f32.mrf.mxu0
        %v499 = vadd.f32 0.0, %v498
        %v500 = vpop.f32.mrf.mxu0
        %v501 = vadd.f32 0.0, %v500
        %502 = vmatmul.bf16.gmra.mxu0 %v410
        %v503 = vpop.f32.mrf.mxu0
        %v504 = vadd.f32 0.0, %v503
        %v505 = vpop.f32.mrf.mxu0
        %v506 = vadd.f32 0.0, %v505
        %507 = vmatmul.bf16.gmra.mxu0 %v411
        %v508 = vpop.f32.mrf.mxu0
        %v509 = vadd.f32 0.0, %v508
        %v510 = vpop.f32.mrf.mxu0
        %v511 = vadd.f32 0.0, %v510
        %512 = vmatmul.bf16.gmra.mxu0 %v412
        %v513 = vpop.f32.mrf.mxu0
        %v514 = vadd.f32 0.0, %v513
        %v515 = vpop.f32.mrf.mxu0
        %v516 = vadd.f32 0.0, %v515
        %517 = vdwg.mxu0
        %v518 = vadd.f32 %v325, %v479
        %v519 = vadd.f32 %v326, %v481
        %v520 = vadd.f32 %v327, %v484
        %v521 = vadd.f32 %v328, %v486
        %v522 = vadd.f32 %v329, %v489
        %v523 = vadd.f32 %v330, %v491
        %v524 = vadd.f32 %v331, %v494
        %v525 = vadd.f32 %v332, %v496
        %v526 = vadd.f32 %v333, %v499
        %v527 = vadd.f32 %v334, %v501
        %v528 = vadd.f32 %v335, %v504
        %v529 = vadd.f32 %v336, %v506
        %v530 = vadd.f32 %v337, %v509
        %v531 = vadd.f32 %v338, %v511
        %v532 = vadd.f32 %v339, %v514
        %v533 = vadd.f32 %v340, %v516
        %534 = vst [vmem:[#allocation2] sm:$0xff] %v518
        %535 = vst [vmem:[#allocation2 + $0x8] sm:$0xff] %v519
        %536 = vst [vmem:[#allocation2 + $0x10] sm:$0xff] %v520
        %537 = vst [vmem:[#allocation2 + $0x18] sm:$0xff] %v521
        %538 = vst [vmem:[#allocation2 + $0x20] sm:$0xff] %v522
        %539 = vst [vmem:[#allocation2 + $0x28] sm:$0xff] %v523
        %540 = vst [vmem:[#allocation2 + $0x30] sm:$0xff] %v524
        %541 = vst [vmem:[#allocation2 + $0x38] sm:$0xff] %v525
        %542 = vst [vmem:[#allocation2 + $0x40] sm:$0xff] %v526
        %543 = vst [vmem:[#allocation2 + $0x48] sm:$0xff] %v527
        %544 = vst [vmem:[#allocation2 + $0x50] sm:$0xff] %v528
        %545 = vst [vmem:[#allocation2 + $0x58] sm:$0xff] %v529
        %546 = vst [vmem:[#allocation2 + $0x60] sm:$0xff] %v530
        %547 = vst [vmem:[#allocation2 + $0x68] sm:$0xff] %v531
        %548 = vst [vmem:[#allocation2 + $0x70] sm:$0xff] %v532
        %549 = vst [vmem:[#allocation2 + $0x78] sm:$0xff] %v533
        %p550 = scmp.eq.s32.totalorder %s19, 2
        // Predicated region
        $region82: #{gcn_forward.7} parent=68 // pred_check
          %p551 = pneg %p550
        $region83: #{gcn_forward.7} parent=68 // pred_check_branch
          %553 = sbr.rel (%p551) target = $region85
        $region84: #{gcn_forward.7} parent=68 // pred_region
          %v554 = vld [vmem:[%s3] sm:$0x1]
          %v555 = vld [vmem:[#allocation2] sm:$0xff]
          %v556 = vld [vmem:[#allocation2 + $0x8] sm:$0xff]
          %v557 = vld [vmem:[#allocation2 + $0x10] sm:$0xff]
          %v558 = vld [vmem:[#allocation2 + $0x18] sm:$0xff]
          %v559 = vld [vmem:[#allocation2 + $0x20] sm:$0xff]
          %v560 = vld [vmem:[#allocation2 + $0x28] sm:$0xff]
          %v561 = vld [vmem:[#allocation2 + $0x30] sm:$0xff]
          %v562 = vld [vmem:[#allocation2 + $0x38] sm:$0xff]
          %v563 = vld [vmem:[#allocation2 + $0x40] sm:$0xff]
          %v564 = vld [vmem:[#allocation2 + $0x48] sm:$0xff]
          %v565 = vld [vmem:[#allocation2 + $0x50] sm:$0xff]
          %v566 = vld [vmem:[#allocation2 + $0x58] sm:$0xff]
          %v567 = vld [vmem:[#allocation2 + $0x60] sm:$0xff]
          %v568 = vld [vmem:[#allocation2 + $0x68] sm:$0xff]
          %v569 = vld [vmem:[#allocation2 + $0x70] sm:$0xff]
          %v570 = vld [vmem:[#allocation2 + $0x78] sm:$0xff]
          %v571 = vadd.f32 %v555, %v556
          %v572 = vadd.f32 %v571, %v557
          %v573 = vadd.f32 %v572, %v558
          %v574 = vadd.f32 %v573, %v559
          %v575 = vadd.f32 %v574, %v560
          %v576 = vadd.f32 %v575, %v561
          %v577 = vadd.f32 %v576, %v562
          %v578 = vadd.f32 %v577, %v563
          %v579 = vadd.f32 %v578, %v564
          %v580 = vadd.f32 %v579, %v565
          %v581 = vadd.f32 %v580, %v566
          %v582 = vadd.f32 %v581, %v567
          %v583 = vadd.f32 %v582, %v568
          %v584 = vadd.f32 %v583, %v569
          %v585 = vadd.f32 %v584, %v570
          %v586 = vrot.slane %v585, 4
          %v587 = vadd.f32 %v585, %v586
          %v588 = vrot.slane %v587, 2
          %v589 = vadd.f32 %v587, %v588
          %v590 = vrot.slane %v589, 1
          %v591 = vadd.f32 %v589, %v590
          %v592 = vadd.f32 %v554, %v591
          %593 = vst [vmem:[%s3] sm:$0x1] %v592
        $region85: #{gcn_forward.7} parent=68 // pred_fallthru
          _
        %p594 = scmp.eq.s32.totalorder %s18, 2
        %p595 = pnand %p594, %p550
        %p596 = pneg %p595
        // Predicated region
        $region86: #{gcn_forward.7} parent=68 // pred_check
          _
        $region87: #{gcn_forward.7} parent=68 // pred_check_branch
          %598 = sbr.rel (%p595) target = $region89
        $region88: #{gcn_forward.7} parent=68 // pred_region
          %v599 = vld [vmem:[%s3] sm:$0x1]
          %v600 = vmul.f32 %v599, 0.0033333334
          %v601 = vld [vmem:[%s2] sm:$0x1]
          %v602 = vadd.f32 %v600, %v601
          %603 = vst [vmem:[%s3] sm:$0x1] %v602
        $region89: #{gcn_forward.7} parent=68 // pred_fallthru
          _
        // Predicated region
        $region90: #{gcn_forward.7} parent=68 // pred_check
          %p604 = pneg %p114
        $region91: #{gcn_forward.7} parent=68 // pred_check_branch
          %606 = sbr.rel (%p604) target = $region93
        $region92: #{gcn_forward.7} parent=68 // pred_region
          _
        $region93: #{gcn_forward.7} parent=68 // pred_fallthru
          _
        // Predicated region
        $region94: #{gcn_forward.7} parent=68 // pred_check
          %p607 = pneg %p114
        $region95: #{gcn_forward.7} parent=68 // pred_check_branch
          %609 = sbr.rel (%p607) target = $region97
        $region96: #{gcn_forward.7} parent=68 // pred_region
          _
        $region97: #{gcn_forward.7} parent=68 // pred_fallthru
          _
      $region69: #{gcn_forward.7} parent=5 // pred_fallthru
        _
      %p610 = scmp.le.s32.totalorder 2, %s9
      // Predicated region
      $region98: #{gcn_forward.7} parent=5 // pred_check
        %p611 = pneg %p610
      $region99: #{gcn_forward.7} parent=5 // pred_check_branch
        %613 = sbr.rel (%p611) target = $region101
      $region100: #{gcn_forward.7} parent=5 // pred_region
        %s614 = ssub.s32 %s9, 2
      $region101: #{gcn_forward.7} parent=5 // pred_fallthru
        _
    $region6: #{gcn_forward.7} parent=1 // loop_footer
      %s13 = sadd.s32 1, %s9
    $region7: #{gcn_forward.7} parent=1 // loop_footer_branch
      %8 = sbr.rel target = $region3
    $region8: #{gcn_forward.7} parent=1 // loop_exit
      _

</llo_original>
